<compile_context>
chip_gen: v5e
topology: v5e:2x2
jax: 0.10.0
libtpu: 0.0.40
codegen_flags: <defaults>
</compile_context>

<pallas_src>
import functools

import jax
import jax.numpy as jnp
from jax.experimental import pallas as pl
from jax.experimental.pallas import tpu as pltpu

# MXU inputs / inter-layer activation stream dtype (accumulation stays f32 via
# preferred_element_type). Set to jnp.float32 for bit-exact f32 semantics.
MXU_DTYPE = jnp.bfloat16

_SCOPED_VMEM_DEFAULT = 16 * 1024 * 1024     # most conservative scoped default (v5e)
_SINGLE_BUFFER_MIN_BYTES = 2 * 1024 * 1024
_MiB = 1024 * 1024


def _round_up(x, m):
    return (x + m - 1) // m * m


def _cdiv(a, b):
    return (a + b - 1) // b


@functools.lru_cache(maxsize=None)
def _vmem_capacity():
    """Physical per-TensorCore VMEM bytes, or None if it cannot be queried."""
    try:
        return int(pltpu.get_tpu_info().vmem_capacity_bytes)
    except Exception:
        return None


def _vmem_cap_bytes():
    cap = _vmem_capacity()
    return cap if cap else 64 * _MiB          # conservative default (v7x-sized)


@functools.lru_cache(maxsize=None)
def _num_tensorcores():
    """Heuristic: v7x has 2 TensorCores per chip (and 64 MiB VMEM per TC)."""
    try:
        kind = jax.devices()[0].device_kind.lower()
        if "v7" in kind:
            return 2
    except Exception:
        pass
    cap = _vmem_capacity()
    if cap is not None and cap <= 80 * _MiB:
        return 2
    return 1


def _vmem_limit_bytes(estimate):
    est = int(estimate * 1.25)                # slack for compiler-internal scratch
    if est <= _SCOPED_VMEM_DEFAULT:
        return None                           # scoped default is plenty
    cap = _vmem_cap_bytes() - 8 * _MiB
    return min(max(est, 32 * _MiB), cap)


def _compiler_params(semantics, vmem_estimate):
    kwargs = dict(dimension_semantics=semantics)
    limit = _vmem_limit_bytes(vmem_estimate)
    if limit is not None:
        kwargs["vmem_limit_bytes"] = limit
    return pltpu.CompilerParams(**kwargs)


def _resident_spec(shape, index_map, nbytes):
    """BlockSpec for a grid-invariant operand: single-buffer once it is large
    enough to matter (double-buffering a constant-index block is VMEM waste)."""
    if nbytes >= _SINGLE_BUFFER_MIN_BYTES:
        return pl.BlockSpec(shape, index_map, pipeline_mode=pl.Buffered(1))
    return pl.BlockSpec(shape, index_map)


# --------------------------- Fused LSTM-layer kernel --------------------------
def _lstm_fused_kernel(*refs, hidden, tt, has_head, unroll):
    if has_head:
        (x_ref, wih_ref, whh_ref, b_ref, wout_ref, bout_ref,
         out_ref, gx_scr, h_scr, c_scr) = refs
    else:
        (x_ref, wih_ref, whh_ref, b_ref,
         out_ref, gx_scr, h_scr, c_scr) = refs
        wout_ref = bout_ref = None

    # Reset the h/c carry at the first time-block of each batch block.
    @pl.when(pl.program_id(1) == 0)
    def _():
        h_scr[...] = jnp.zeros_like(h_scr)
        c_scr[...] = jnp.zeros_like(c_scr)

    w_ih = wih_ref[...]            # (D,  4Hp) resident, MXU dtype
    w_hh = whh_ref[...]            # (Hp, 4Hp) resident, MXU dtype
    bias = b_ref[...]              # (1,  4Hp) f32

    # ---- Phase 1 (fused): input projection for the whole time block. -------
    # No sequential dependence, so all TT matmuls are issued before the
    # recurrence; the recurrence then only carries the h @ W_hh matmul.
    def gx_step(k, carry):
        xk = x_ref[k].astype(w_ih.dtype)                     # cast in-kernel
        gx_scr[k] = jnp.dot(xk, w_ih,
                            preferred_element_type=jnp.float32) + bias
        return carry

    jax.lax.fori_loop(0, tt, gx_step, 0, unroll=unroll)

    if has_head:
        w_out = wout_ref[...]      # (Hp, Op) resident, MXU dtype
        b_out = bout_ref[...]      # (1,  Op) f32

    # sigmoid via tanh: one EUP push instead of two (exp + reciprocal).
    def sig(v):
        return 0.5 * (jnp.tanh(0.5 * v) + 1.0)

    # ---- Phase 2: sequential recurrence over the TT timesteps. -------------
    def step(k, carry):
        h, c = carry                                         # (TB, Hp) f32
        gates = gx_scr[k] + jnp.dot(h.astype(w_hh.dtype), w_hh,
                                    preferred_element_type=jnp.float32)
        i_g = sig(gates[:, 0 * hidden:1 * hidden])
        f_g = sig(gates[:, 1 * hidden:2 * hidden])
        g_g = jnp.tanh(gates[:, 2 * hidden:3 * hidden])
        o_g = sig(gates[:, 3 * hidden:4 * hidden])
        c_new = f_g * c + i_g * g_g
        h_new = o_g * jnp.tanh(c_new)
        if has_head:
            # Fused Linear head on the last layer (lane-dense Op output).
            out_ref[k] = (jnp.dot(h_new.astype(w_out.dtype), w_out,
                                  preferred_element_type=jnp.float32) + b_out)
        else:
            out_ref[k] = h_new.astype(out_ref.dtype)         # bf16 h stream
        return h_new, c_new

    h, c = jax.lax.fori_loop(0, tt, step, (h_scr[...], c_scr[...]),
                             unroll=unroll)
    h_scr[...] = h
    c_scr[...] = c


def lstm_fused_layer(x_tm, wih_t, whh_t, bias_row, head=None):
    """One LSTM layer over a whole (time-major) sequence in a single pallas_call.

    x_tm: (T, B, D).  wih_t: (D, 4Hp).  whh_t: (Hp, 4Hp).  bias_row: (1, 4Hp).
    head: None, or (wout_t (Hp, Op), bout (1, Op)) — fused Linear epilogue.
    Returns (T, B, Hp) MXU_DTYPE h-seq, or (T, B, Op) f32 head output.
    """
    T, B_in, D = x_tm.shape
    Hp = whh_t.shape[0]
    G = 4 * Hp
    has_head = head is not None

    # ---- Batch tile: split across both TensorCores on dual-core parts. -----
    Bp = _round_up(B_in, 8)
    TB = min(Bp, 256)
    if _num_tensorcores() >= 2 and Bp >= 16:
        TB = min(TB, _round_up(_cdiv(Bp, 2), 8))
    n_b = _cdiv(Bp, TB)
    Bp = TB * n_b

    # ---- TT from a generation-aware per-core VMEM budget. ------------------
    x_it = jnp.dtype(x_tm.dtype).itemsize
    w_it = jnp.dtype(wih_t.dtype).itemsize
    if has_head:
        out_w, out_dtype = head[0].shape[1], jnp.float32
    else:
        out_w, out_dtype = Hp, MXU_DTYPE
    out_it = jnp.dtype(out_dtype).itemsize

    wih_bytes = D * G * w_it
    whh_bytes = Hp * G * w_it
    fixed = (wih_bytes * (1 if wih_bytes >= _SINGLE_BUFFER_MIN_BYTES else 2)
             + whh_bytes * (1 if whh_bytes >= _SINGLE_BUFFER_MIN_BYTES else 2)
             + 2 * G * 4                       # bias blocks
             + 2 * TB * Hp * 4)                # h/c scratch
    if has_head:
        fixed += 2 * (Hp * out_w * w_it + out_w * 4)

    per_tt = TB * (2 * D * x_it           # x blocks (double-buffered)
                   + 2 * out_w * out_it   # output blocks (double-buffered)
                   + G * 4)               # gates_x VMEM scratch (f32)
    budget = max(_vmem_cap_bytes() - 24 * _MiB, 8 * _MiB)
    tt_max = max(1, min(T, (budget - fixed) // per_tt, 64))
    n_t = _cdiv(T, tt_max)
    TT = _cdiv(T, n_t)                    # balanced blocks (minimal padding)
    Tp = TT * n_t

    if Tp != T or Bp != B_in:
        x_tm = jnp.pad(x_tm, ((0, Tp - T), (0, Bp - B_in), (0, 0)))

    vmem_est = fixed + TT * per_tt
    unroll = min(TT, 16) if Hp <= 256 else (4 if Hp <= 1024 else 2)
    unroll = max(1, min(unroll, TT))

    in_specs = [
        pl.BlockSpec((TT, TB, D), lambda b, s: (s, b, 0)),
        _resident_spec((D, G), lambda b, s: (0, 0), wih_bytes),
        _resident_spec((Hp, G), lambda b, s: (0, 0), whh_bytes),
        pl.BlockSpec((1, G), lambda b, s: (0, 0)),
    ]
    operands = [x_tm, wih_t, whh_t, bias_row]
    if has_head:
        wout_t, bout = head
        wout_bytes = Hp * out_w * w_it
        in_specs += [
            _resident_spec((Hp, out_w), lambda b, s: (0, 0), wout_bytes),
            pl.BlockSpec((1, out_w), lambda b, s: (0, 0)),
        ]
        operands += [wout_t, bout]

    kernel = functools.partial(_lstm_fused_kernel, hidden=Hp, tt=TT,
                               has_head=has_head, unroll=unroll)
    out = pl.pallas_call(
        kernel,
        out_shape=jax.ShapeDtypeStruct((Tp, Bp, out_w), out_dtype),
        grid_spec=pltpu.PrefetchScalarGridSpec(
            num_scalar_prefetch=0,
            grid=(n_b, n_t),
            in_specs=in_specs,
            out_specs=pl.BlockSpec((TT, TB, out_w), lambda b, s: (s, b, 0)),
            scratch_shapes=[
                pltpu.VMEM((TT, TB, G), jnp.float32),   # gates_x (time block)
                pltpu.VMEM((TB, Hp), jnp.float32),      # h carry
                pltpu.VMEM((TB, Hp), jnp.float32),      # c carry
            ],
        ),
        compiler_params=_compiler_params(("parallel", "arbitrary"), vmem_est),
    )(*operands)

    if Tp != T or Bp != B_in:
        out = out[:T, :B_in]
    return out


# -------------------------- Parameters & layout prep --------------------------
def init_params(key, input_size, hidden_size, layer_num, out_features=2):
    """PyTorch-layout parameters (w_ih (4H, D), w_hh (4H, H), gates i,f,g,o)."""
    params = {"lstm": []}
    k = 1.0 / jnp.sqrt(hidden_size)
    for layer in range(layer_num):
        in_dim = input_size if layer == 0 else hidden_size
        key, k1, k2, k3, k4 = jax.random.split(key, 5)
        w_ih = jax.random.uniform(k1, (4 * hidden_size, in_dim),
                                  jnp.float32, -k, k)
        w_hh = jax.random.uniform(k2, (4 * hidden_size, hidden_size),
                                  jnp.float32, -k, k)
        b_ih = jax.random.uniform(k3, (4 * hidden_size,), jnp.float32, -k, k)
        b_hh = jax.random.uniform(k4, (4 * hidden_size,), jnp.float32, -k, k)
        params["lstm"].append((w_ih, w_hh, b_ih, b_hh))
    key, k5, k6 = jax.random.split(key, 3)
    ko = 1.0 / jnp.sqrt(hidden_size)
    params["w_out"] = jax.random.uniform(k5, (out_features, hidden_size),
                                         jnp.float32, -ko, ko)
    params["b_out"] = jax.random.uniform(k6, (out_features,),
                                         jnp.float32, -ko, ko)
    return params


def prepare_params(params):
    """One-time layout prep: transpose to (in, out), pad each gate's H to a
    multiple of 128 (lane-aligned gate slices, lane-dense h stores) and cast
    MXU operands to MXU_DTYPE.  Padded h/c columns stay exactly 0 through time
    (zero weights & bias -> c_pad = 0.5*0 + 0.5*0, h_pad = 0.5*tanh(0) = 0)."""
    H = params["lstm"][0][1].shape[1]
    Hp = _round_up(H, 128)
    layers = []
    for li, (w_ih, w_hh, b_ih, b_hh) in enumerate(params["lstm"]):
        D = w_ih.shape[1]
        Dp = D if li == 0 else Hp                  # later layers consume padded h
        wih_g = w_ih.reshape(4, H, D)
        wih_p = jnp.zeros((4, Hp, Dp), jnp.float32).at[:, :H, :D].set(wih_g)
        wih_t = jnp.transpose(wih_p, (2, 0, 1)).reshape(Dp, 4 * Hp)
        whh_g = w_hh.reshape(4, H, H)
        whh_p = jnp.zeros((4, Hp, Hp), jnp.float32).at[:, :H, :H].set(whh_g)
        whh_t = jnp.transpose(whh_p, (2, 0, 1)).reshape(Hp, 4 * Hp)
        b = (b_ih + b_hh).reshape(4, H)
        b_p = jnp.zeros((4, Hp), jnp.float32).at[:, :H].set(b).reshape(1, 4 * Hp)
        layers.append((wih_t.astype(MXU_DTYPE), whh_t.astype(MXU_DTYPE), b_p))
    O = params["w_out"].shape[0]
    Op = _round_up(O, 128)                         # lane-dense head output
    wout = jnp.zeros((Hp, Op), jnp.float32).at[:H, :O].set(params["w_out"].T)
    bout = jnp.zeros((1, Op), jnp.float32).at[0, :O].set(params["b_out"])
    return {"layers": layers, "w_out": wout.astype(MXU_DTYPE), "b_out": bout,
            "H": H, "Hp": Hp, "O": O, "Op": Op}


# ------------------------------ Model (wrapper) -------------------------------
def lstm_model_forward(x, prepared):
    """Matches LSTM.forward: x (B, T, INPUT_SIZE) -> (B, T, 2)."""
    x = x.astype(jnp.float32)
    B, T, _ = x.shape
    Bp = _round_up(B, 8)                       # sublane-align the batch
    if Bp != B:
        x = jnp.pad(x, ((0, Bp - B), (0, 0), (0, 0)))
    h = jnp.transpose(x, (1, 0, 2))            # time-major (T, Bp, D)
    layers = prepared["layers"]
    n = len(layers)
    for li, (wih_t, whh_t, bias_row) in enumerate(layers):
        head = (prepared["w_out"], prepared["b_out"]) if li == n - 1 else None
        h = lstm_fused_layer(h, wih_t, whh_t, bias_row, head=head)
    out = jnp.transpose(h, (1, 0, 2))          # (Bp, T, Op)
    return out[:B, :, :prepared["O"]]


# Pure-JAX f32 reference (for a quick correctness check).
def lstm_model_reference(x, params):
    x = x.astype(jnp.float32)
    seq = x
    for (w_ih, w_hh, b_ih, b_hh) in params["lstm"]:
        B, T, _ = seq.shape
        H = w_hh.shape[1]
        h = jnp.zeros((B, H), jnp.float32)
        c = jnp.zeros((B, H), jnp.float32)
        outs = []
        for t in range(T):
            gates = seq[:, t] @ w_ih.T + h @ w_hh.T + b_ih + b_hh
            i = jax.nn.sigmoid(gates[:, 0 * H:1 * H])
            f = jax.nn.sigmoid(gates[:, 1 * H:2 * H])
            g = jnp.tanh(gates[:, 2 * H:3 * H])
            o = jax.nn.sigmoid(gates[:, 3 * H:4 * H])
            c = f * c + i * g
            h = o * jnp.tanh(c)
            outs.append(h)
        seq = jnp.stack(outs, axis=1)
    return seq @ params["w_out"].T + params["b_out"]


if __name__ == "__main__":
    B, T = 2, 8
    INPUT_SIZE, HIDDEN_SIZE, LAYER_NUM = 16, 32, 2

    key = jax.random.PRNGKey(0)
    key, xk, pk = jax.random.split(key, 3)
    x = jax.random.normal(xk, (B, T, INPUT_SIZE), jnp.float32)
    params = init_params(pk, INPUT_SIZE, HIDDEN_SIZE, LAYER_NUM)
    prepped = prepare_params(params)           # one-time layout / dtype prep

    out = lstm_model_forward(x, prepped)
    out = jax.block_until_ready(out)

    ref = lstm_model_reference(x, params)
    assert out.shape == (B, T, 2), out.shape
    # Tolerance accounts for bf16 MXU inputs / bf16 inter-layer stream
    # (f32 accumulation & carries) vs the f32 reference.
    assert jnp.allclose(out, ref, atol=3e-2, rtol=3e-2), \
        float(jnp.max(jnp.abs(out - ref)))

    print("KERNEL_OK")
</pallas_src>

<mosaic_0001>
module attributes {stable_mosaic.version = 11 : i64} {
  func.func @_lstm_fused_kernel(%arg0: i32, %arg1: i32, %arg2: memref<8x8x16xf32, #tpu.memory_space<vmem>>, %arg3: memref<16x512xbf16, #tpu.memory_space<vmem>>, %arg4: memref<128x512xbf16, #tpu.memory_space<vmem>>, %arg5: memref<1x512xf32, #tpu.memory_space<vmem>>, %arg6: memref<8x8x128xbf16, #tpu.memory_space<vmem>>, %arg7: memref<8x8x512xf32, #tpu.memory_space<vmem>>, %arg8: memref<8x128xf32, #tpu.memory_space<vmem>>, %arg9: memref<8x128xf32, #tpu.memory_space<vmem>>) attributes {dimension_semantics = [#tpu.dimension_semantics<parallel>, #tpu.dimension_semantics<arbitrary>], iteration_bounds = array<i64: 1, 1>, scalar_prefetch = 0 : i64, scratch_operands = 3 : i64, tpu.core_type = #tpu.core_type<tc>, window_params = [{transform_indices = @transform_0, window_bounds = array<i64: 8, 8, 16>}, {pipeline_mode = #tpu.pipeline_mode<synchronous>, transform_indices = @transform_1, window_bounds = array<i64: 16, 512>}, {pipeline_mode = #tpu.pipeline_mode<synchronous>, transform_indices = @transform_2, window_bounds = array<i64: 128, 512>}, {pipeline_mode = #tpu.pipeline_mode<synchronous>, transform_indices = @transform_3, window_bounds = array<i64: 1, 512>}, {transform_indices = @transform_4, window_bounds = array<i64: 8, 8, 128>}]} {
    %c0_i32 = arith.constant 0 : i32
    %0 = arith.cmpi eq, %arg1, %c0_i32 : i32
    %1 = arith.extui %0 : i1 to i32
    %c0_i32_0 = arith.constant 0 : i32
    %2 = arith.cmpi ne, %1, %c0_i32_0 : i32
    scf.if %2 {
      %cst_175 = arith.constant 0.000000e+00 : f32
      %434 = vector.broadcast %cst_175 : f32 to vector<8x128xf32>
      %c0_176 = arith.constant 0 : index
      %c0_177 = arith.constant 0 : index
      %435 = vector.load %arg8[%c0_176, %c0_177] : memref<8x128xf32, #tpu.memory_space<vmem>>, vector<8x128xf32>
      tpu.vector_store %arg8[%c0_176, %c0_177], %434 {strides = array<i32>} : memref<8x128xf32, #tpu.memory_space<vmem>>, vector<8x128xf32>,
      %cst_178 = arith.constant 0.000000e+00 : f32
      %436 = vector.broadcast %cst_178 : f32 to vector<8x128xf32>
      %c0_179 = arith.constant 0 : index
      %c0_180 = arith.constant 0 : index
      %437 = vector.load %arg9[%c0_179, %c0_180] : memref<8x128xf32, #tpu.memory_space<vmem>>, vector<8x128xf32>
      tpu.vector_store %arg9[%c0_179, %c0_180], %436 {strides = array<i32>} : memref<8x128xf32, #tpu.memory_space<vmem>>, vector<8x128xf32>,
    } else {
    }
    %c0 = arith.constant 0 : index
    %c0_1 = arith.constant 0 : index
    %3 = vector.load %arg3[%c0, %c0_1] : memref<16x512xbf16, #tpu.memory_space<vmem>>, vector<16x512xbf16>
    %c0_2 = arith.constant 0 : index
    %c0_3 = arith.constant 0 : index
    %4 = vector.load %arg4[%c0_2, %c0_3] : memref<128x512xbf16, #tpu.memory_space<vmem>>, vector<128x512xbf16>
    %c0_4 = arith.constant 0 : index
    %c0_5 = arith.constant 0 : index
    %5 = vector.load %arg5[%c0_4, %c0_5] : memref<1x512xf32, #tpu.memory_space<vmem>>, vector<1x512xf32>
    %c0_i32_6 = arith.constant 0 : i32
    %6 = arith.index_cast %c0_i32_6 : i32 to index
    %c0_7 = arith.constant 0 : index
    %c0_8 = arith.constant 0 : index
    %7 = vector.load %arg2[%6, %c0_7, %c0_8] : memref<8x8x16xf32, #tpu.memory_space<vmem>>, vector<1x8x16xf32>
    %8 = vector.shape_cast %7 : vector<1x8x16xf32> to vector<8x16xf32>
    %9 = arith.truncf %8 : vector<8x16xf32> to vector<8x16xbf16>
    %cst = arith.constant dense<0.000000e+00> : vector<8x512xf32>
    %10 = tpu.matmul %9, %3, %cst {dimension_numbers = #tpu.dot_dimension_numbers<[1], [0], [0], [1], [0, 0, 1, 1], [], []>} : vector<8x16xbf16>, vector<16x512xbf16>, vector<8x512xf32> -> vector<8x512xf32>
    %11 = vector.broadcast %5 : vector<1x512xf32> to vector<8x512xf32>
    %12 = arith.addf %10, %11 : vector<8x512xf32>
    %13 = arith.index_cast %c0_i32_6 : i32 to index
    %c0_9 = arith.constant 0 : index
    %c0_10 = arith.constant 0 : index
    %14 = vector.load %arg7[%13, %c0_9, %c0_10] : memref<8x8x512xf32, #tpu.memory_space<vmem>>, vector<1x8x512xf32>
    %15 = vector.shape_cast %14 : vector<1x8x512xf32> to vector<8x512xf32>
    %16 = vector.shape_cast %12 : vector<8x512xf32> to vector<1x8x512xf32>
    tpu.vector_store %arg7[%13, %c0_9, %c0_10], %16 {strides = array<i32>} : memref<8x8x512xf32, #tpu.memory_space<vmem>>, vector<1x8x512xf32>,
    %c1_i32 = arith.constant 1 : i32
    %17 = arith.index_cast %c1_i32 : i32 to index
    %c0_11 = arith.constant 0 : index
    %c0_12 = arith.constant 0 : index
    %18 = vector.load %arg2[%17, %c0_11, %c0_12] : memref<8x8x16xf32, #tpu.memory_space<vmem>>, vector<1x8x16xf32>
    %19 = vector.shape_cast %18 : vector<1x8x16xf32> to vector<8x16xf32>
    %20 = arith.truncf %19 : vector<8x16xf32> to vector<8x16xbf16>
    %cst_13 = arith.constant dense<0.000000e+00> : vector<8x512xf32>
    %21 = tpu.matmul %20, %3, %cst_13 {dimension_numbers = #tpu.dot_dimension_numbers<[1], [0], [0], [1], [0, 0, 1, 1], [], []>} : vector<8x16xbf16>, vector<16x512xbf16>, vector<8x512xf32> -> vector<8x512xf32>
    %22 = vector.broadcast %5 : vector<1x512xf32> to vector<8x512xf32>
    %23 = arith.addf %21, %22 : vector<8x512xf32>
    %24 = arith.index_cast %c1_i32 : i32 to index
    %c0_14 = arith.constant 0 : index
    %c0_15 = arith.constant 0 : index
    %25 = vector.load %arg7[%24, %c0_14, %c0_15] : memref<8x8x512xf32, #tpu.memory_space<vmem>>, vector<1x8x512xf32>
    %26 = vector.shape_cast %25 : vector<1x8x512xf32> to vector<8x512xf32>
    %27 = vector.shape_cast %23 : vector<8x512xf32> to vector<1x8x512xf32>
    tpu.vector_store %arg7[%24, %c0_14, %c0_15], %27 {strides = array<i32>} : memref<8x8x512xf32, #tpu.memory_space<vmem>>, vector<1x8x512xf32>,
    %c2_i32 = arith.constant 2 : i32
    %28 = arith.index_cast %c2_i32 : i32 to index
    %c0_16 = arith.constant 0 : index
    %c0_17 = arith.constant 0 : index
    %29 = vector.load %arg2[%28, %c0_16, %c0_17] : memref<8x8x16xf32, #tpu.memory_space<vmem>>, vector<1x8x16xf32>
    %30 = vector.shape_cast %29 : vector<1x8x16xf32> to vector<8x16xf32>
    %31 = arith.truncf %30 : vector<8x16xf32> to vector<8x16xbf16>
    %cst_18 = arith.constant dense<0.000000e+00> : vector<8x512xf32>
    %32 = tpu.matmul %31, %3, %cst_18 {dimension_numbers = #tpu.dot_dimension_numbers<[1], [0], [0], [1], [0, 0, 1, 1], [], []>} : vector<8x16xbf16>, vector<16x512xbf16>, vector<8x512xf32> -> vector<8x512xf32>
    %33 = vector.broadcast %5 : vector<1x512xf32> to vector<8x512xf32>
    %34 = arith.addf %32, %33 : vector<8x512xf32>
    %35 = arith.index_cast %c2_i32 : i32 to index
    %c0_19 = arith.constant 0 : index
    %c0_20 = arith.constant 0 : index
    %36 = vector.load %arg7[%35, %c0_19, %c0_20] : memref<8x8x512xf32, #tpu.memory_space<vmem>>, vector<1x8x512xf32>
    %37 = vector.shape_cast %36 : vector<1x8x512xf32> to vector<8x512xf32>
    %38 = vector.shape_cast %34 : vector<8x512xf32> to vector<1x8x512xf32>
    tpu.vector_store %arg7[%35, %c0_19, %c0_20], %38 {strides = array<i32>} : memref<8x8x512xf32, #tpu.memory_space<vmem>>, vector<1x8x512xf32>,
    %c3_i32 = arith.constant 3 : i32
    %39 = arith.index_cast %c3_i32 : i32 to index
    %c0_21 = arith.constant 0 : index
    %c0_22 = arith.constant 0 : index
    %40 = vector.load %arg2[%39, %c0_21, %c0_22] : memref<8x8x16xf32, #tpu.memory_space<vmem>>, vector<1x8x16xf32>
    %41 = vector.shape_cast %40 : vector<1x8x16xf32> to vector<8x16xf32>
    %42 = arith.truncf %41 : vector<8x16xf32> to vector<8x16xbf16>
    %cst_23 = arith.constant dense<0.000000e+00> : vector<8x512xf32>
    %43 = tpu.matmul %42, %3, %cst_23 {dimension_numbers = #tpu.dot_dimension_numbers<[1], [0], [0], [1], [0, 0, 1, 1], [], []>} : vector<8x16xbf16>, vector<16x512xbf16>, vector<8x512xf32> -> vector<8x512xf32>
    %44 = vector.broadcast %5 : vector<1x512xf32> to vector<8x512xf32>
    %45 = arith.addf %43, %44 : vector<8x512xf32>
    %46 = arith.index_cast %c3_i32 : i32 to index
    %c0_24 = arith.constant 0 : index
    %c0_25 = arith.constant 0 : index
    %47 = vector.load %arg7[%46, %c0_24, %c0_25] : memref<8x8x512xf32, #tpu.memory_space<vmem>>, vector<1x8x512xf32>
    %48 = vector.shape_cast %47 : vector<1x8x512xf32> to vector<8x512xf32>
    %49 = vector.shape_cast %45 : vector<8x512xf32> to vector<1x8x512xf32>
    tpu.vector_store %arg7[%46, %c0_24, %c0_25], %49 {strides = array<i32>} : memref<8x8x512xf32, #tpu.memory_space<vmem>>, vector<1x8x512xf32>,
    %c4_i32 = arith.constant 4 : i32
    %50 = arith.index_cast %c4_i32 : i32 to index
    %c0_26 = arith.constant 0 : index
    %c0_27 = arith.constant 0 : index
    %51 = vector.load %arg2[%50, %c0_26, %c0_27] : memref<8x8x16xf32, #tpu.memory_space<vmem>>, vector<1x8x16xf32>
    %52 = vector.shape_cast %51 : vector<1x8x16xf32> to vector<8x16xf32>
    %53 = arith.truncf %52 : vector<8x16xf32> to vector<8x16xbf16>
    %cst_28 = arith.constant dense<0.000000e+00> : vector<8x512xf32>
    %54 = tpu.matmul %53, %3, %cst_28 {dimension_numbers = #tpu.dot_dimension_numbers<[1], [0], [0], [1], [0, 0, 1, 1], [], []>} : vector<8x16xbf16>, vector<16x512xbf16>, vector<8x512xf32> -> vector<8x512xf32>
    %55 = vector.broadcast %5 : vector<1x512xf32> to vector<8x512xf32>
    %56 = arith.addf %54, %55 : vector<8x512xf32>
    %57 = arith.index_cast %c4_i32 : i32 to index
    %c0_29 = arith.constant 0 : index
    %c0_30 = arith.constant 0 : index
    %58 = vector.load %arg7[%57, %c0_29, %c0_30] : memref<8x8x512xf32, #tpu.memory_space<vmem>>, vector<1x8x512xf32>
    %59 = vector.shape_cast %58 : vector<1x8x512xf32> to vector<8x512xf32>
    %60 = vector.shape_cast %56 : vector<8x512xf32> to vector<1x8x512xf32>
    tpu.vector_store %arg7[%57, %c0_29, %c0_30], %60 {strides = array<i32>} : memref<8x8x512xf32, #tpu.memory_space<vmem>>, vector<1x8x512xf32>,
    %c5_i32 = arith.constant 5 : i32
    %61 = arith.index_cast %c5_i32 : i32 to index
    %c0_31 = arith.constant 0 : index
    %c0_32 = arith.constant 0 : index
    %62 = vector.load %arg2[%61, %c0_31, %c0_32] : memref<8x8x16xf32, #tpu.memory_space<vmem>>, vector<1x8x16xf32>
    %63 = vector.shape_cast %62 : vector<1x8x16xf32> to vector<8x16xf32>
    %64 = arith.truncf %63 : vector<8x16xf32> to vector<8x16xbf16>
    %cst_33 = arith.constant dense<0.000000e+00> : vector<8x512xf32>
    %65 = tpu.matmul %64, %3, %cst_33 {dimension_numbers = #tpu.dot_dimension_numbers<[1], [0], [0], [1], [0, 0, 1, 1], [], []>} : vector<8x16xbf16>, vector<16x512xbf16>, vector<8x512xf32> -> vector<8x512xf32>
    %66 = vector.broadcast %5 : vector<1x512xf32> to vector<8x512xf32>
    %67 = arith.addf %65, %66 : vector<8x512xf32>
    %68 = arith.index_cast %c5_i32 : i32 to index
    %c0_34 = arith.constant 0 : index
    %c0_35 = arith.constant 0 : index
    %69 = vector.load %arg7[%68, %c0_34, %c0_35] : memref<8x8x512xf32, #tpu.memory_space<vmem>>, vector<1x8x512xf32>
    %70 = vector.shape_cast %69 : vector<1x8x512xf32> to vector<8x512xf32>
    %71 = vector.shape_cast %67 : vector<8x512xf32> to vector<1x8x512xf32>
    tpu.vector_store %arg7[%68, %c0_34, %c0_35], %71 {strides = array<i32>} : memref<8x8x512xf32, #tpu.memory_space<vmem>>, vector<1x8x512xf32>,
    %c6_i32 = arith.constant 6 : i32
    %72 = arith.index_cast %c6_i32 : i32 to index
    %c0_36 = arith.constant 0 : index
    %c0_37 = arith.constant 0 : index
    %73 = vector.load %arg2[%72, %c0_36, %c0_37] : memref<8x8x16xf32, #tpu.memory_space<vmem>>, vector<1x8x16xf32>
    %74 = vector.shape_cast %73 : vector<1x8x16xf32> to vector<8x16xf32>
    %75 = arith.truncf %74 : vector<8x16xf32> to vector<8x16xbf16>
    %cst_38 = arith.constant dense<0.000000e+00> : vector<8x512xf32>
    %76 = tpu.matmul %75, %3, %cst_38 {dimension_numbers = #tpu.dot_dimension_numbers<[1], [0], [0], [1], [0, 0, 1, 1], [], []>} : vector<8x16xbf16>, vector<16x512xbf16>, vector<8x512xf32> -> vector<8x512xf32>
    %77 = vector.broadcast %5 : vector<1x512xf32> to vector<8x512xf32>
    %78 = arith.addf %76, %77 : vector<8x512xf32>
    %79 = arith.index_cast %c6_i32 : i32 to index
    %c0_39 = arith.constant 0 : index
    %c0_40 = arith.constant 0 : index
    %80 = vector.load %arg7[%79, %c0_39, %c0_40] : memref<8x8x512xf32, #tpu.memory_space<vmem>>, vector<1x8x512xf32>
    %81 = vector.shape_cast %80 : vector<1x8x512xf32> to vector<8x512xf32>
    %82 = vector.shape_cast %78 : vector<8x512xf32> to vector<1x8x512xf32>
    tpu.vector_store %arg7[%79, %c0_39, %c0_40], %82 {strides = array<i32>} : memref<8x8x512xf32, #tpu.memory_space<vmem>>, vector<1x8x512xf32>,
    %c7_i32 = arith.constant 7 : i32
    %83 = arith.index_cast %c7_i32 : i32 to index
    %c0_41 = arith.constant 0 : index
    %c0_42 = arith.constant 0 : index
    %84 = vector.load %arg2[%83, %c0_41, %c0_42] : memref<8x8x16xf32, #tpu.memory_space<vmem>>, vector<1x8x16xf32>
    %85 = vector.shape_cast %84 : vector<1x8x16xf32> to vector<8x16xf32>
    %86 = arith.truncf %85 : vector<8x16xf32> to vector<8x16xbf16>
    %cst_43 = arith.constant dense<0.000000e+00> : vector<8x512xf32>
    %87 = tpu.matmul %86, %3, %cst_43 {dimension_numbers = #tpu.dot_dimension_numbers<[1], [0], [0], [1], [0, 0, 1, 1], [], []>} : vector<8x16xbf16>, vector<16x512xbf16>, vector<8x512xf32> -> vector<8x512xf32>
    %88 = vector.broadcast %5 : vector<1x512xf32> to vector<8x512xf32>
    %89 = arith.addf %87, %88 : vector<8x512xf32>
    %90 = arith.index_cast %c7_i32 : i32 to index
    %c0_44 = arith.constant 0 : index
    %c0_45 = arith.constant 0 : index
    %91 = vector.load %arg7[%90, %c0_44, %c0_45] : memref<8x8x512xf32, #tpu.memory_space<vmem>>, vector<1x8x512xf32>
    %92 = vector.shape_cast %91 : vector<1x8x512xf32> to vector<8x512xf32>
    %93 = vector.shape_cast %89 : vector<8x512xf32> to vector<1x8x512xf32>
    tpu.vector_store %arg7[%90, %c0_44, %c0_45], %93 {strides = array<i32>} : memref<8x8x512xf32, #tpu.memory_space<vmem>>, vector<1x8x512xf32>,
    %c8_i32 = arith.constant 8 : i32
    %c0_46 = arith.constant 0 : index
    %c0_47 = arith.constant 0 : index
    %94 = vector.load %arg8[%c0_46, %c0_47] : memref<8x128xf32, #tpu.memory_space<vmem>>, vector<8x128xf32>
    %c0_48 = arith.constant 0 : index
    %c0_49 = arith.constant 0 : index
    %95 = vector.load %arg9[%c0_48, %c0_49] : memref<8x128xf32, #tpu.memory_space<vmem>>, vector<8x128xf32>
    %c0_i32_50 = arith.constant 0 : i32
    %96 = arith.index_cast %c0_i32_50 : i32 to index
    %c0_51 = arith.constant 0 : index
    %c0_52 = arith.constant 0 : index
    %97 = vector.load %arg7[%96, %c0_51, %c0_52] : memref<8x8x512xf32, #tpu.memory_space<vmem>>, vector<1x8x512xf32>
    %98 = vector.shape_cast %97 : vector<1x8x512xf32> to vector<8x512xf32>
    %99 = arith.truncf %94 : vector<8x128xf32> to vector<8x128xbf16>
    %cst_53 = arith.constant dense<0.000000e+00> : vector<8x512xf32>
    %100 = tpu.matmul %99, %4, %cst_53 {dimension_numbers = #tpu.dot_dimension_numbers<[1], [0], [0], [1], [0, 0, 1, 1], [], []>} : vector<8x128xbf16>, vector<128x512xbf16>, vector<8x512xf32> -> vector<8x512xf32>
    %101 = arith.addf %98, %100 : vector<8x512xf32>
    %102 = vector.extract_strided_slice %101 {offsets = [0, 0], sizes = [8, 128], strides = [1, 1]} : vector<8x512xf32> to vector<8x128xf32>
    %cst_54 = arith.constant 5.000000e-01 : f32
    %103 = vector.broadcast %cst_54 : f32 to vector<8x128xf32>
    %104 = arith.mulf %103, %102 : vector<8x128xf32>
    %105 = math.tanh %104 : vector<8x128xf32>
    %cst_55 = arith.constant 1.000000e+00 : f32
    %106 = vector.broadcast %cst_55 : f32 to vector<8x128xf32>
    %107 = arith.addf %105, %106 : vector<8x128xf32>
    %cst_56 = arith.constant 5.000000e-01 : f32
    %108 = vector.broadcast %cst_56 : f32 to vector<8x128xf32>
    %109 = arith.mulf %108, %107 : vector<8x128xf32>
    %110 = vector.extract_strided_slice %101 {offsets = [0, 128], sizes = [8, 128], strides = [1, 1]} : vector<8x512xf32> to vector<8x128xf32>
    %cst_57 = arith.constant 5.000000e-01 : f32
    %111 = vector.broadcast %cst_57 : f32 to vector<8x128xf32>
    %112 = arith.mulf %111, %110 : vector<8x128xf32>
    %113 = math.tanh %112 : vector<8x128xf32>
    %cst_58 = arith.constant 1.000000e+00 : f32
    %114 = vector.broadcast %cst_58 : f32 to vector<8x128xf32>
    %115 = arith.addf %113, %114 : vector<8x128xf32>
    %cst_59 = arith.constant 5.000000e-01 : f32
    %116 = vector.broadcast %cst_59 : f32 to vector<8x128xf32>
    %117 = arith.mulf %116, %115 : vector<8x128xf32>
    %118 = vector.extract_strided_slice %101 {offsets = [0, 256], sizes = [8, 128], strides = [1, 1]} : vector<8x512xf32> to vector<8x128xf32>
    %119 = math.tanh %118 : vector<8x128xf32>
    %120 = vector.extract_strided_slice %101 {offsets = [0, 384], sizes = [8, 128], strides = [1, 1]} : vector<8x512xf32> to vector<8x128xf32>
    %cst_60 = arith.constant 5.000000e-01 : f32
    %121 = vector.broadcast %cst_60 : f32 to vector<8x128xf32>
    %122 = arith.mulf %121, %120 : vector<8x128xf32>
    %123 = math.tanh %122 : vector<8x128xf32>
    %cst_61 = arith.constant 1.000000e+00 : f32
    %124 = vector.broadcast %cst_61 : f32 to vector<8x128xf32>
    %125 = arith.addf %123, %124 : vector<8x128xf32>
    %cst_62 = arith.constant 5.000000e-01 : f32
    %126 = vector.broadcast %cst_62 : f32 to vector<8x128xf32>
    %127 = arith.mulf %126, %125 : vector<8x128xf32>
    %128 = arith.mulf %117, %95 : vector<8x128xf32>
    %129 = arith.mulf %109, %119 : vector<8x128xf32>
    %130 = arith.addf %128, %129 : vector<8x128xf32>
    %131 = math.tanh %130 : vector<8x128xf32>
    %132 = arith.mulf %127, %131 : vector<8x128xf32>
    %133 = arith.truncf %132 : vector<8x128xf32> to vector<8x128xbf16>
    %134 = arith.index_cast %c0_i32_50 : i32 to index
    %c0_63 = arith.constant 0 : index
    %c0_64 = arith.constant 0 : index
    %135 = vector.load %arg6[%134, %c0_63, %c0_64] : memref<8x8x128xbf16, #tpu.memory_space<vmem>>, vector<1x8x128xbf16>
    %136 = vector.shape_cast %135 : vector<1x8x128xbf16> to vector<8x128xbf16>
    %137 = vector.shape_cast %133 : vector<8x128xbf16> to vector<1x8x128xbf16>
    tpu.vector_store %arg6[%134, %c0_63, %c0_64], %137 {strides = array<i32>} : memref<8x8x128xbf16, #tpu.memory_space<vmem>>, vector<1x8x128xbf16>,
    %c1_i32_65 = arith.constant 1 : i32
    %138 = arith.index_cast %c1_i32_65 : i32 to index
    %c0_66 = arith.constant 0 : index
    %c0_67 = arith.constant 0 : index
    %139 = vector.load %arg7[%138, %c0_66, %c0_67] : memref<8x8x512xf32, #tpu.memory_space<vmem>>, vector<1x8x512xf32>
    %140 = vector.shape_cast %139 : vector<1x8x512xf32> to vector<8x512xf32>
    %141 = arith.truncf %132 : vector<8x128xf32> to vector<8x128xbf16>
    %cst_68 = arith.constant dense<0.000000e+00> : vector<8x512xf32>
    %142 = tpu.matmul %141, %4, %cst_68 {dimension_numbers = #tpu.dot_dimension_numbers<[1], [0], [0], [1], [0, 0, 1, 1], [], []>} : vector<8x128xbf16>, vector<128x512xbf16>, vector<8x512xf32> -> vector<8x512xf32>
    %143 = arith.addf %140, %142 : vector<8x512xf32>
    %144 = vector.extract_strided_slice %143 {offsets = [0, 0], sizes = [8, 128], strides = [1, 1]} : vector<8x512xf32> to vector<8x128xf32>
    %cst_69 = arith.constant 5.000000e-01 : f32
    %145 = vector.broadcast %cst_69 : f32 to vector<8x128xf32>
    %146 = arith.mulf %145, %144 : vector<8x128xf32>
    %147 = math.tanh %146 : vector<8x128xf32>
    %cst_70 = arith.constant 1.000000e+00 : f32
    %148 = vector.broadcast %cst_70 : f32 to vector<8x128xf32>
    %149 = arith.addf %147, %148 : vector<8x128xf32>
    %cst_71 = arith.constant 5.000000e-01 : f32
    %150 = vector.broadcast %cst_71 : f32 to vector<8x128xf32>
    %151 = arith.mulf %150, %149 : vector<8x128xf32>
    %152 = vector.extract_strided_slice %143 {offsets = [0, 128], sizes = [8, 128], strides = [1, 1]} : vector<8x512xf32> to vector<8x128xf32>
    %cst_72 = arith.constant 5.000000e-01 : f32
    %153 = vector.broadcast %cst_72 : f32 to vector<8x128xf32>
    %154 = arith.mulf %153, %152 : vector<8x128xf32>
    %155 = math.tanh %154 : vector<8x128xf32>
    %cst_73 = arith.constant 1.000000e+00 : f32
    %156 = vector.broadcast %cst_73 : f32 to vector<8x128xf32>
    %157 = arith.addf %155, %156 : vector<8x128xf32>
    %cst_74 = arith.constant 5.000000e-01 : f32
    %158 = vector.broadcast %cst_74 : f32 to vector<8x128xf32>
    %159 = arith.mulf %158, %157 : vector<8x128xf32>
    %160 = vector.extract_strided_slice %143 {offsets = [0, 256], sizes = [8, 128], strides = [1, 1]} : vector<8x512xf32> to vector<8x128xf32>
    %161 = math.tanh %160 : vector<8x128xf32>
    %162 = vector.extract_strided_slice %143 {offsets = [0, 384], sizes = [8, 128], strides = [1, 1]} : vector<8x512xf32> to vector<8x128xf32>
    %cst_75 = arith.constant 5.000000e-01 : f32
    %163 = vector.broadcast %cst_75 : f32 to vector<8x128xf32>
    %164 = arith.mulf %163, %162 : vector<8x128xf32>
    %165 = math.tanh %164 : vector<8x128xf32>
    %cst_76 = arith.constant 1.000000e+00 : f32
    %166 = vector.broadcast %cst_76 : f32 to vector<8x128xf32>
    %167 = arith.addf %165, %166 : vector<8x128xf32>
    %cst_77 = arith.constant 5.000000e-01 : f32
    %168 = vector.broadcast %cst_77 : f32 to vector<8x128xf32>
    %169 = arith.mulf %168, %167 : vector<8x128xf32>
    %170 = arith.mulf %159, %130 : vector<8x128xf32>
    %171 = arith.mulf %151, %161 : vector<8x128xf32>
    %172 = arith.addf %170, %171 : vector<8x128xf32>
    %173 = math.tanh %172 : vector<8x128xf32>
    %174 = arith.mulf %169, %173 : vector<8x128xf32>
    %175 = arith.truncf %174 : vector<8x128xf32> to vector<8x128xbf16>
    %176 = arith.index_cast %c1_i32_65 : i32 to index
    %c0_78 = arith.constant 0 : index
    %c0_79 = arith.constant 0 : index
    %177 = vector.load %arg6[%176, %c0_78, %c0_79] : memref<8x8x128xbf16, #tpu.memory_space<vmem>>, vector<1x8x128xbf16>
    %178 = vector.shape_cast %177 : vector<1x8x128xbf16> to vector<8x128xbf16>
    %179 = vector.shape_cast %175 : vector<8x128xbf16> to vector<1x8x128xbf16>
    tpu.vector_store %arg6[%176, %c0_78, %c0_79], %179 {strides = array<i32>} : memref<8x8x128xbf16, #tpu.memory_space<vmem>>, vector<1x8x128xbf16>,
    %c2_i32_80 = arith.constant 2 : i32
    %180 = arith.index_cast %c2_i32_80 : i32 to index
    %c0_81 = arith.constant 0 : index
    %c0_82 = arith.constant 0 : index
    %181 = vector.load %arg7[%180, %c0_81, %c0_82] : memref<8x8x512xf32, #tpu.memory_space<vmem>>, vector<1x8x512xf32>
    %182 = vector.shape_cast %181 : vector<1x8x512xf32> to vector<8x512xf32>
    %183 = arith.truncf %174 : vector<8x128xf32> to vector<8x128xbf16>
    %cst_83 = arith.constant dense<0.000000e+00> : vector<8x512xf32>
    %184 = tpu.matmul %183, %4, %cst_83 {dimension_numbers = #tpu.dot_dimension_numbers<[1], [0], [0], [1], [0, 0, 1, 1], [], []>} : vector<8x128xbf16>, vector<128x512xbf16>, vector<8x512xf32> -> vector<8x512xf32>
    %185 = arith.addf %182, %184 : vector<8x512xf32>
    %186 = vector.extract_strided_slice %185 {offsets = [0, 0], sizes = [8, 128], strides = [1, 1]} : vector<8x512xf32> to vector<8x128xf32>
    %cst_84 = arith.constant 5.000000e-01 : f32
    %187 = vector.broadcast %cst_84 : f32 to vector<8x128xf32>
    %188 = arith.mulf %187, %186 : vector<8x128xf32>
    %189 = math.tanh %188 : vector<8x128xf32>
    %cst_85 = arith.constant 1.000000e+00 : f32
    %190 = vector.broadcast %cst_85 : f32 to vector<8x128xf32>
    %191 = arith.addf %189, %190 : vector<8x128xf32>
    %cst_86 = arith.constant 5.000000e-01 : f32
    %192 = vector.broadcast %cst_86 : f32 to vector<8x128xf32>
    %193 = arith.mulf %192, %191 : vector<8x128xf32>
    %194 = vector.extract_strided_slice %185 {offsets = [0, 128], sizes = [8, 128], strides = [1, 1]} : vector<8x512xf32> to vector<8x128xf32>
    %cst_87 = arith.constant 5.000000e-01 : f32
    %195 = vector.broadcast %cst_87 : f32 to vector<8x128xf32>
    %196 = arith.mulf %195, %194 : vector<8x128xf32>
    %197 = math.tanh %196 : vector<8x128xf32>
    %cst_88 = arith.constant 1.000000e+00 : f32
    %198 = vector.broadcast %cst_88 : f32 to vector<8x128xf32>
    %199 = arith.addf %197, %198 : vector<8x128xf32>
    %cst_89 = arith.constant 5.000000e-01 : f32
    %200 = vector.broadcast %cst_89 : f32 to vector<8x128xf32>
    %201 = arith.mulf %200, %199 : vector<8x128xf32>
    %202 = vector.extract_strided_slice %185 {offsets = [0, 256], sizes = [8, 128], strides = [1, 1]} : vector<8x512xf32> to vector<8x128xf32>
    %203 = math.tanh %202 : vector<8x128xf32>
    %204 = vector.extract_strided_slice %185 {offsets = [0, 384], sizes = [8, 128], strides = [1, 1]} : vector<8x512xf32> to vector<8x128xf32>
    %cst_90 = arith.constant 5.000000e-01 : f32
    %205 = vector.broadcast %cst_90 : f32 to vector<8x128xf32>
    %206 = arith.mulf %205, %204 : vector<8x128xf32>
    %207 = math.tanh %206 : vector<8x128xf32>
    %cst_91 = arith.constant 1.000000e+00 : f32
    %208 = vector.broadcast %cst_91 : f32 to vector<8x128xf32>
    %209 = arith.addf %207, %208 : vector<8x128xf32>
    %cst_92 = arith.constant 5.000000e-01 : f32
    %210 = vector.broadcast %cst_92 : f32 to vector<8x128xf32>
    %211 = arith.mulf %210, %209 : vector<8x128xf32>
    %212 = arith.mulf %201, %172 : vector<8x128xf32>
    %213 = arith.mulf %193, %203 : vector<8x128xf32>
    %214 = arith.addf %212, %213 : vector<8x128xf32>
    %215 = math.tanh %214 : vector<8x128xf32>
    %216 = arith.mulf %211, %215 : vector<8x128xf32>
    %217 = arith.truncf %216 : vector<8x128xf32> to vector<8x128xbf16>
    %218 = arith.index_cast %c2_i32_80 : i32 to index
    %c0_93 = arith.constant 0 : index
    %c0_94 = arith.constant 0 : index
    %219 = vector.load %arg6[%218, %c0_93, %c0_94] : memref<8x8x128xbf16, #tpu.memory_space<vmem>>, vector<1x8x128xbf16>
    %220 = vector.shape_cast %219 : vector<1x8x128xbf16> to vector<8x128xbf16>
    %221 = vector.shape_cast %217 : vector<8x128xbf16> to vector<1x8x128xbf16>
    tpu.vector_store %arg6[%218, %c0_93, %c0_94], %221 {strides = array<i32>} : memref<8x8x128xbf16, #tpu.memory_space<vmem>>, vector<1x8x128xbf16>,
    %c3_i32_95 = arith.constant 3 : i32
    %222 = arith.index_cast %c3_i32_95 : i32 to index
    %c0_96 = arith.constant 0 : index
    %c0_97 = arith.constant 0 : index
    %223 = vector.load %arg7[%222, %c0_96, %c0_97] : memref<8x8x512xf32, #tpu.memory_space<vmem>>, vector<1x8x512xf32>
    %224 = vector.shape_cast %223 : vector<1x8x512xf32> to vector<8x512xf32>
    %225 = arith.truncf %216 : vector<8x128xf32> to vector<8x128xbf16>
    %cst_98 = arith.constant dense<0.000000e+00> : vector<8x512xf32>
    %226 = tpu.matmul %225, %4, %cst_98 {dimension_numbers = #tpu.dot_dimension_numbers<[1], [0], [0], [1], [0, 0, 1, 1], [], []>} : vector<8x128xbf16>, vector<128x512xbf16>, vector<8x512xf32> -> vector<8x512xf32>
    %227 = arith.addf %224, %226 : vector<8x512xf32>
    %228 = vector.extract_strided_slice %227 {offsets = [0, 0], sizes = [8, 128], strides = [1, 1]} : vector<8x512xf32> to vector<8x128xf32>
    %cst_99 = arith.constant 5.000000e-01 : f32
    %229 = vector.broadcast %cst_99 : f32 to vector<8x128xf32>
    %230 = arith.mulf %229, %228 : vector<8x128xf32>
    %231 = math.tanh %230 : vector<8x128xf32>
    %cst_100 = arith.constant 1.000000e+00 : f32
    %232 = vector.broadcast %cst_100 : f32 to vector<8x128xf32>
    %233 = arith.addf %231, %232 : vector<8x128xf32>
    %cst_101 = arith.constant 5.000000e-01 : f32
    %234 = vector.broadcast %cst_101 : f32 to vector<8x128xf32>
    %235 = arith.mulf %234, %233 : vector<8x128xf32>
    %236 = vector.extract_strided_slice %227 {offsets = [0, 128], sizes = [8, 128], strides = [1, 1]} : vector<8x512xf32> to vector<8x128xf32>
    %cst_102 = arith.constant 5.000000e-01 : f32
    %237 = vector.broadcast %cst_102 : f32 to vector<8x128xf32>
    %238 = arith.mulf %237, %236 : vector<8x128xf32>
    %239 = math.tanh %238 : vector<8x128xf32>
    %cst_103 = arith.constant 1.000000e+00 : f32
    %240 = vector.broadcast %cst_103 : f32 to vector<8x128xf32>
    %241 = arith.addf %239, %240 : vector<8x128xf32>
    %cst_104 = arith.constant 5.000000e-01 : f32
    %242 = vector.broadcast %cst_104 : f32 to vector<8x128xf32>
    %243 = arith.mulf %242, %241 : vector<8x128xf32>
    %244 = vector.extract_strided_slice %227 {offsets = [0, 256], sizes = [8, 128], strides = [1, 1]} : vector<8x512xf32> to vector<8x128xf32>
    %245 = math.tanh %244 : vector<8x128xf32>
    %246 = vector.extract_strided_slice %227 {offsets = [0, 384], sizes = [8, 128], strides = [1, 1]} : vector<8x512xf32> to vector<8x128xf32>
    %cst_105 = arith.constant 5.000000e-01 : f32
    %247 = vector.broadcast %cst_105 : f32 to vector<8x128xf32>
    %248 = arith.mulf %247, %246 : vector<8x128xf32>
    %249 = math.tanh %248 : vector<8x128xf32>
    %cst_106 = arith.constant 1.000000e+00 : f32
    %250 = vector.broadcast %cst_106 : f32 to vector<8x128xf32>
    %251 = arith.addf %249, %250 : vector<8x128xf32>
    %cst_107 = arith.constant 5.000000e-01 : f32
    %252 = vector.broadcast %cst_107 : f32 to vector<8x128xf32>
    %253 = arith.mulf %252, %251 : vector<8x128xf32>
    %254 = arith.mulf %243, %214 : vector<8x128xf32>
    %255 = arith.mulf %235, %245 : vector<8x128xf32>
    %256 = arith.addf %254, %255 : vector<8x128xf32>
    %257 = math.tanh %256 : vector<8x128xf32>
    %258 = arith.mulf %253, %257 : vector<8x128xf32>
    %259 = arith.truncf %258 : vector<8x128xf32> to vector<8x128xbf16>
    %260 = arith.index_cast %c3_i32_95 : i32 to index
    %c0_108 = arith.constant 0 : index
    %c0_109 = arith.constant 0 : index
    %261 = vector.load %arg6[%260, %c0_108, %c0_109] : memref<8x8x128xbf16, #tpu.memory_space<vmem>>, vector<1x8x128xbf16>
    %262 = vector.shape_cast %261 : vector<1x8x128xbf16> to vector<8x128xbf16>
    %263 = vector.shape_cast %259 : vector<8x128xbf16> to vector<1x8x128xbf16>
    tpu.vector_store %arg6[%260, %c0_108, %c0_109], %263 {strides = array<i32>} : memref<8x8x128xbf16, #tpu.memory_space<vmem>>, vector<1x8x128xbf16>,
    %c4_i32_110 = arith.constant 4 : i32
    %264 = arith.index_cast %c4_i32_110 : i32 to index
    %c0_111 = arith.constant 0 : index
    %c0_112 = arith.constant 0 : index
    %265 = vector.load %arg7[%264, %c0_111, %c0_112] : memref<8x8x512xf32, #tpu.memory_space<vmem>>, vector<1x8x512xf32>
    %266 = vector.shape_cast %265 : vector<1x8x512xf32> to vector<8x512xf32>
    %267 = arith.truncf %258 : vector<8x128xf32> to vector<8x128xbf16>
    %cst_113 = arith.constant dense<0.000000e+00> : vector<8x512xf32>
    %268 = tpu.matmul %267, %4, %cst_113 {dimension_numbers = #tpu.dot_dimension_numbers<[1], [0], [0], [1], [0, 0, 1, 1], [], []>} : vector<8x128xbf16>, vector<128x512xbf16>, vector<8x512xf32> -> vector<8x512xf32>
    %269 = arith.addf %266, %268 : vector<8x512xf32>
    %270 = vector.extract_strided_slice %269 {offsets = [0, 0], sizes = [8, 128], strides = [1, 1]} : vector<8x512xf32> to vector<8x128xf32>
    %cst_114 = arith.constant 5.000000e-01 : f32
    %271 = vector.broadcast %cst_114 : f32 to vector<8x128xf32>
    %272 = arith.mulf %271, %270 : vector<8x128xf32>
    %273 = math.tanh %272 : vector<8x128xf32>
    %cst_115 = arith.constant 1.000000e+00 : f32
    %274 = vector.broadcast %cst_115 : f32 to vector<8x128xf32>
    %275 = arith.addf %273, %274 : vector<8x128xf32>
    %cst_116 = arith.constant 5.000000e-01 : f32
    %276 = vector.broadcast %cst_116 : f32 to vector<8x128xf32>
    %277 = arith.mulf %276, %275 : vector<8x128xf32>
    %278 = vector.extract_strided_slice %269 {offsets = [0, 128], sizes = [8, 128], strides = [1, 1]} : vector<8x512xf32> to vector<8x128xf32>
    %cst_117 = arith.constant 5.000000e-01 : f32
    %279 = vector.broadcast %cst_117 : f32 to vector<8x128xf32>
    %280 = arith.mulf %279, %278 : vector<8x128xf32>
    %281 = math.tanh %280 : vector<8x128xf32>
    %cst_118 = arith.constant 1.000000e+00 : f32
    %282 = vector.broadcast %cst_118 : f32 to vector<8x128xf32>
    %283 = arith.addf %281, %282 : vector<8x128xf32>
    %cst_119 = arith.constant 5.000000e-01 : f32
    %284 = vector.broadcast %cst_119 : f32 to vector<8x128xf32>
    %285 = arith.mulf %284, %283 : vector<8x128xf32>
    %286 = vector.extract_strided_slice %269 {offsets = [0, 256], sizes = [8, 128], strides = [1, 1]} : vector<8x512xf32> to vector<8x128xf32>
    %287 = math.tanh %286 : vector<8x128xf32>
    %288 = vector.extract_strided_slice %269 {offsets = [0, 384], sizes = [8, 128], strides = [1, 1]} : vector<8x512xf32> to vector<8x128xf32>
    %cst_120 = arith.constant 5.000000e-01 : f32
    %289 = vector.broadcast %cst_120 : f32 to vector<8x128xf32>
    %290 = arith.mulf %289, %288 : vector<8x128xf32>
    %291 = math.tanh %290 : vector<8x128xf32>
    %cst_121 = arith.constant 1.000000e+00 : f32
    %292 = vector.broadcast %cst_121 : f32 to vector<8x128xf32>
    %293 = arith.addf %291, %292 : vector<8x128xf32>
    %cst_122 = arith.constant 5.000000e-01 : f32
    %294 = vector.broadcast %cst_122 : f32 to vector<8x128xf32>
    %295 = arith.mulf %294, %293 : vector<8x128xf32>
    %296 = arith.mulf %285, %256 : vector<8x128xf32>
    %297 = arith.mulf %277, %287 : vector<8x128xf32>
    %298 = arith.addf %296, %297 : vector<8x128xf32>
    %299 = math.tanh %298 : vector<8x128xf32>
    %300 = arith.mulf %295, %299 : vector<8x128xf32>
    %301 = arith.truncf %300 : vector<8x128xf32> to vector<8x128xbf16>
    %302 = arith.index_cast %c4_i32_110 : i32 to index
    %c0_123 = arith.constant 0 : index
    %c0_124 = arith.constant 0 : index
    %303 = vector.load %arg6[%302, %c0_123, %c0_124] : memref<8x8x128xbf16, #tpu.memory_space<vmem>>, vector<1x8x128xbf16>
    %304 = vector.shape_cast %303 : vector<1x8x128xbf16> to vector<8x128xbf16>
    %305 = vector.shape_cast %301 : vector<8x128xbf16> to vector<1x8x128xbf16>
    tpu.vector_store %arg6[%302, %c0_123, %c0_124], %305 {strides = array<i32>} : memref<8x8x128xbf16, #tpu.memory_space<vmem>>, vector<1x8x128xbf16>,
    %c5_i32_125 = arith.constant 5 : i32
    %306 = arith.index_cast %c5_i32_125 : i32 to index
    %c0_126 = arith.constant 0 : index
    %c0_127 = arith.constant 0 : index
    %307 = vector.load %arg7[%306, %c0_126, %c0_127] : memref<8x8x512xf32, #tpu.memory_space<vmem>>, vector<1x8x512xf32>
    %308 = vector.shape_cast %307 : vector<1x8x512xf32> to vector<8x512xf32>
    %309 = arith.truncf %300 : vector<8x128xf32> to vector<8x128xbf16>
    %cst_128 = arith.constant dense<0.000000e+00> : vector<8x512xf32>
    %310 = tpu.matmul %309, %4, %cst_128 {dimension_numbers = #tpu.dot_dimension_numbers<[1], [0], [0], [1], [0, 0, 1, 1], [], []>} : vector<8x128xbf16>, vector<128x512xbf16>, vector<8x512xf32> -> vector<8x512xf32>
    %311 = arith.addf %308, %310 : vector<8x512xf32>
    %312 = vector.extract_strided_slice %311 {offsets = [0, 0], sizes = [8, 128], strides = [1, 1]} : vector<8x512xf32> to vector<8x128xf32>
    %cst_129 = arith.constant 5.000000e-01 : f32
    %313 = vector.broadcast %cst_129 : f32 to vector<8x128xf32>
    %314 = arith.mulf %313, %312 : vector<8x128xf32>
    %315 = math.tanh %314 : vector<8x128xf32>
    %cst_130 = arith.constant 1.000000e+00 : f32
    %316 = vector.broadcast %cst_130 : f32 to vector<8x128xf32>
    %317 = arith.addf %315, %316 : vector<8x128xf32>
    %cst_131 = arith.constant 5.000000e-01 : f32
    %318 = vector.broadcast %cst_131 : f32 to vector<8x128xf32>
    %319 = arith.mulf %318, %317 : vector<8x128xf32>
    %320 = vector.extract_strided_slice %311 {offsets = [0, 128], sizes = [8, 128], strides = [1, 1]} : vector<8x512xf32> to vector<8x128xf32>
    %cst_132 = arith.constant 5.000000e-01 : f32
    %321 = vector.broadcast %cst_132 : f32 to vector<8x128xf32>
    %322 = arith.mulf %321, %320 : vector<8x128xf32>
    %323 = math.tanh %322 : vector<8x128xf32>
    %cst_133 = arith.constant 1.000000e+00 : f32
    %324 = vector.broadcast %cst_133 : f32 to vector<8x128xf32>
    %325 = arith.addf %323, %324 : vector<8x128xf32>
    %cst_134 = arith.constant 5.000000e-01 : f32
    %326 = vector.broadcast %cst_134 : f32 to vector<8x128xf32>
    %327 = arith.mulf %326, %325 : vector<8x128xf32>
    %328 = vector.extract_strided_slice %311 {offsets = [0, 256], sizes = [8, 128], strides = [1, 1]} : vector<8x512xf32> to vector<8x128xf32>
    %329 = math.tanh %328 : vector<8x128xf32>
    %330 = vector.extract_strided_slice %311 {offsets = [0, 384], sizes = [8, 128], strides = [1, 1]} : vector<8x512xf32> to vector<8x128xf32>
    %cst_135 = arith.constant 5.000000e-01 : f32
    %331 = vector.broadcast %cst_135 : f32 to vector<8x128xf32>
    %332 = arith.mulf %331, %330 : vector<8x128xf32>
    %333 = math.tanh %332 : vector<8x128xf32>
    %cst_136 = arith.constant 1.000000e+00 : f32
    %334 = vector.broadcast %cst_136 : f32 to vector<8x128xf32>
    %335 = arith.addf %333, %334 : vector<8x128xf32>
    %cst_137 = arith.constant 5.000000e-01 : f32
    %336 = vector.broadcast %cst_137 : f32 to vector<8x128xf32>
    %337 = arith.mulf %336, %335 : vector<8x128xf32>
    %338 = arith.mulf %327, %298 : vector<8x128xf32>
    %339 = arith.mulf %319, %329 : vector<8x128xf32>
    %340 = arith.addf %338, %339 : vector<8x128xf32>
    %341 = math.tanh %340 : vector<8x128xf32>
    %342 = arith.mulf %337, %341 : vector<8x128xf32>
    %343 = arith.truncf %342 : vector<8x128xf32> to vector<8x128xbf16>
    %344 = arith.index_cast %c5_i32_125 : i32 to index
    %c0_138 = arith.constant 0 : index
    %c0_139 = arith.constant 0 : index
    %345 = vector.load %arg6[%344, %c0_138, %c0_139] : memref<8x8x128xbf16, #tpu.memory_space<vmem>>, vector<1x8x128xbf16>
    %346 = vector.shape_cast %345 : vector<1x8x128xbf16> to vector<8x128xbf16>
    %347 = vector.shape_cast %343 : vector<8x128xbf16> to vector<1x8x128xbf16>
    tpu.vector_store %arg6[%344, %c0_138, %c0_139], %347 {strides = array<i32>} : memref<8x8x128xbf16, #tpu.memory_space<vmem>>, vector<1x8x128xbf16>,
    %c6_i32_140 = arith.constant 6 : i32
    %348 = arith.index_cast %c6_i32_140 : i32 to index
    %c0_141 = arith.constant 0 : index
    %c0_142 = arith.constant 0 : index
    %349 = vector.load %arg7[%348, %c0_141, %c0_142] : memref<8x8x512xf32, #tpu.memory_space<vmem>>, vector<1x8x512xf32>
    %350 = vector.shape_cast %349 : vector<1x8x512xf32> to vector<8x512xf32>
    %351 = arith.truncf %342 : vector<8x128xf32> to vector<8x128xbf16>
    %cst_143 = arith.constant dense<0.000000e+00> : vector<8x512xf32>
    %352 = tpu.matmul %351, %4, %cst_143 {dimension_numbers = #tpu.dot_dimension_numbers<[1], [0], [0], [1], [0, 0, 1, 1], [], []>} : vector<8x128xbf16>, vector<128x512xbf16>, vector<8x512xf32> -> vector<8x512xf32>
    %353 = arith.addf %350, %352 : vector<8x512xf32>
    %354 = vector.extract_strided_slice %353 {offsets = [0, 0], sizes = [8, 128], strides = [1, 1]} : vector<8x512xf32> to vector<8x128xf32>
    %cst_144 = arith.constant 5.000000e-01 : f32
    %355 = vector.broadcast %cst_144 : f32 to vector<8x128xf32>
    %356 = arith.mulf %355, %354 : vector<8x128xf32>
    %357 = math.tanh %356 : vector<8x128xf32>
    %cst_145 = arith.constant 1.000000e+00 : f32
    %358 = vector.broadcast %cst_145 : f32 to vector<8x128xf32>
    %359 = arith.addf %357, %358 : vector<8x128xf32>
    %cst_146 = arith.constant 5.000000e-01 : f32
    %360 = vector.broadcast %cst_146 : f32 to vector<8x128xf32>
    %361 = arith.mulf %360, %359 : vector<8x128xf32>
    %362 = vector.extract_strided_slice %353 {offsets = [0, 128], sizes = [8, 128], strides = [1, 1]} : vector<8x512xf32> to vector<8x128xf32>
    %cst_147 = arith.constant 5.000000e-01 : f32
    %363 = vector.broadcast %cst_147 : f32 to vector<8x128xf32>
    %364 = arith.mulf %363, %362 : vector<8x128xf32>
    %365 = math.tanh %364 : vector<8x128xf32>
    %cst_148 = arith.constant 1.000000e+00 : f32
    %366 = vector.broadcast %cst_148 : f32 to vector<8x128xf32>
    %367 = arith.addf %365, %366 : vector<8x128xf32>
    %cst_149 = arith.constant 5.000000e-01 : f32
    %368 = vector.broadcast %cst_149 : f32 to vector<8x128xf32>
    %369 = arith.mulf %368, %367 : vector<8x128xf32>
    %370 = vector.extract_strided_slice %353 {offsets = [0, 256], sizes = [8, 128], strides = [1, 1]} : vector<8x512xf32> to vector<8x128xf32>
    %371 = math.tanh %370 : vector<8x128xf32>
    %372 = vector.extract_strided_slice %353 {offsets = [0, 384], sizes = [8, 128], strides = [1, 1]} : vector<8x512xf32> to vector<8x128xf32>
    %cst_150 = arith.constant 5.000000e-01 : f32
    %373 = vector.broadcast %cst_150 : f32 to vector<8x128xf32>
    %374 = arith.mulf %373, %372 : vector<8x128xf32>
    %375 = math.tanh %374 : vector<8x128xf32>
    %cst_151 = arith.constant 1.000000e+00 : f32
    %376 = vector.broadcast %cst_151 : f32 to vector<8x128xf32>
    %377 = arith.addf %375, %376 : vector<8x128xf32>
    %cst_152 = arith.constant 5.000000e-01 : f32
    %378 = vector.broadcast %cst_152 : f32 to vector<8x128xf32>
    %379 = arith.mulf %378, %377 : vector<8x128xf32>
    %380 = arith.mulf %369, %340 : vector<8x128xf32>
    %381 = arith.mulf %361, %371 : vector<8x128xf32>
    %382 = arith.addf %380, %381 : vector<8x128xf32>
    %383 = math.tanh %382 : vector<8x128xf32>
    %384 = arith.mulf %379, %383 : vector<8x128xf32>
    %385 = arith.truncf %384 : vector<8x128xf32> to vector<8x128xbf16>
    %386 = arith.index_cast %c6_i32_140 : i32 to index
    %c0_153 = arith.constant 0 : index
    %c0_154 = arith.constant 0 : index
    %387 = vector.load %arg6[%386, %c0_153, %c0_154] : memref<8x8x128xbf16, #tpu.memory_space<vmem>>, vector<1x8x128xbf16>
    %388 = vector.shape_cast %387 : vector<1x8x128xbf16> to vector<8x128xbf16>
    %389 = vector.shape_cast %385 : vector<8x128xbf16> to vector<1x8x128xbf16>
    tpu.vector_store %arg6[%386, %c0_153, %c0_154], %389 {strides = array<i32>} : memref<8x8x128xbf16, #tpu.memory_space<vmem>>, vector<1x8x128xbf16>,
    %c7_i32_155 = arith.constant 7 : i32
    %390 = arith.index_cast %c7_i32_155 : i32 to index
    %c0_156 = arith.constant 0 : index
    %c0_157 = arith.constant 0 : index
    %391 = vector.load %arg7[%390, %c0_156, %c0_157] : memref<8x8x512xf32, #tpu.memory_space<vmem>>, vector<1x8x512xf32>
    %392 = vector.shape_cast %391 : vector<1x8x512xf32> to vector<8x512xf32>
    %393 = arith.truncf %384 : vector<8x128xf32> to vector<8x128xbf16>
    %cst_158 = arith.constant dense<0.000000e+00> : vector<8x512xf32>
    %394 = tpu.matmul %393, %4, %cst_158 {dimension_numbers = #tpu.dot_dimension_numbers<[1], [0], [0], [1], [0, 0, 1, 1], [], []>} : vector<8x128xbf16>, vector<128x512xbf16>, vector<8x512xf32> -> vector<8x512xf32>
    %395 = arith.addf %392, %394 : vector<8x512xf32>
    %396 = vector.extract_strided_slice %395 {offsets = [0, 0], sizes = [8, 128], strides = [1, 1]} : vector<8x512xf32> to vector<8x128xf32>
    %cst_159 = arith.constant 5.000000e-01 : f32
    %397 = vector.broadcast %cst_159 : f32 to vector<8x128xf32>
    %398 = arith.mulf %397, %396 : vector<8x128xf32>
    %399 = math.tanh %398 : vector<8x128xf32>
    %cst_160 = arith.constant 1.000000e+00 : f32
    %400 = vector.broadcast %cst_160 : f32 to vector<8x128xf32>
    %401 = arith.addf %399, %400 : vector<8x128xf32>
    %cst_161 = arith.constant 5.000000e-01 : f32
    %402 = vector.broadcast %cst_161 : f32 to vector<8x128xf32>
    %403 = arith.mulf %402, %401 : vector<8x128xf32>
    %404 = vector.extract_strided_slice %395 {offsets = [0, 128], sizes = [8, 128], strides = [1, 1]} : vector<8x512xf32> to vector<8x128xf32>
    %cst_162 = arith.constant 5.000000e-01 : f32
    %405 = vector.broadcast %cst_162 : f32 to vector<8x128xf32>
    %406 = arith.mulf %405, %404 : vector<8x128xf32>
    %407 = math.tanh %406 : vector<8x128xf32>
    %cst_163 = arith.constant 1.000000e+00 : f32
    %408 = vector.broadcast %cst_163 : f32 to vector<8x128xf32>
    %409 = arith.addf %407, %408 : vector<8x128xf32>
    %cst_164 = arith.constant 5.000000e-01 : f32
    %410 = vector.broadcast %cst_164 : f32 to vector<8x128xf32>
    %411 = arith.mulf %410, %409 : vector<8x128xf32>
    %412 = vector.extract_strided_slice %395 {offsets = [0, 256], sizes = [8, 128], strides = [1, 1]} : vector<8x512xf32> to vector<8x128xf32>
    %413 = math.tanh %412 : vector<8x128xf32>
    %414 = vector.extract_strided_slice %395 {offsets = [0, 384], sizes = [8, 128], strides = [1, 1]} : vector<8x512xf32> to vector<8x128xf32>
    %cst_165 = arith.constant 5.000000e-01 : f32
    %415 = vector.broadcast %cst_165 : f32 to vector<8x128xf32>
    %416 = arith.mulf %415, %414 : vector<8x128xf32>
    %417 = math.tanh %416 : vector<8x128xf32>
    %cst_166 = arith.constant 1.000000e+00 : f32
    %418 = vector.broadcast %cst_166 : f32 to vector<8x128xf32>
    %419 = arith.addf %417, %418 : vector<8x128xf32>
    %cst_167 = arith.constant 5.000000e-01 : f32
    %420 = vector.broadcast %cst_167 : f32 to vector<8x128xf32>
    %421 = arith.mulf %420, %419 : vector<8x128xf32>
    %422 = arith.mulf %411, %382 : vector<8x128xf32>
    %423 = arith.mulf %403, %413 : vector<8x128xf32>
    %424 = arith.addf %422, %423 : vector<8x128xf32>
    %425 = math.tanh %424 : vector<8x128xf32>
    %426 = arith.mulf %421, %425 : vector<8x128xf32>
    %427 = arith.truncf %426 : vector<8x128xf32> to vector<8x128xbf16>
    %428 = arith.index_cast %c7_i32_155 : i32 to index
    %c0_168 = arith.constant 0 : index
    %c0_169 = arith.constant 0 : index
    %429 = vector.load %arg6[%428, %c0_168, %c0_169] : memref<8x8x128xbf16, #tpu.memory_space<vmem>>, vector<1x8x128xbf16>
    %430 = vector.shape_cast %429 : vector<1x8x128xbf16> to vector<8x128xbf16>
    %431 = vector.shape_cast %427 : vector<8x128xbf16> to vector<1x8x128xbf16>
    tpu.vector_store %arg6[%428, %c0_168, %c0_169], %431 {strides = array<i32>} : memref<8x8x128xbf16, #tpu.memory_space<vmem>>, vector<1x8x128xbf16>,
    %c8_i32_170 = arith.constant 8 : i32
    %c0_171 = arith.constant 0 : index
    %c0_172 = arith.constant 0 : index
    %432 = vector.load %arg8[%c0_171, %c0_172] : memref<8x128xf32, #tpu.memory_space<vmem>>, vector<8x128xf32>
    tpu.vector_store %arg8[%c0_171, %c0_172], %426 {strides = array<i32>} : memref<8x128xf32, #tpu.memory_space<vmem>>, vector<8x128xf32>,
    %c0_173 = arith.constant 0 : index
    %c0_174 = arith.constant 0 : index
    %433 = vector.load %arg9[%c0_173, %c0_174] : memref<8x128xf32, #tpu.memory_space<vmem>>, vector<8x128xf32>
    tpu.vector_store %arg9[%c0_173, %c0_174], %424 {strides = array<i32>} : memref<8x128xf32, #tpu.memory_space<vmem>>, vector<8x128xf32>,
    return
  }
  func.func @transform_0(%arg0: i32, %arg1: i32) -> (i32, i32, i32) {
    %c0_i32 = arith.constant 0 : i32
    %c0_i32_0 = arith.constant 0 : i32
    return %arg1, %arg0, %c0_i32 : i32, i32, i32
  }
  func.func @transform_1(%arg0: i32, %arg1: i32) -> (i32, i32) {
    %c0_i32 = arith.constant 0 : i32
    %c0_i32_0 = arith.constant 0 : i32
    %c0_i32_1 = arith.constant 0 : i32
    return %c0_i32, %c0_i32_0 : i32, i32
  }
  func.func @transform_2(%arg0: i32, %arg1: i32) -> (i32, i32) {
    %c0_i32 = arith.constant 0 : i32
    %c0_i32_0 = arith.constant 0 : i32
    %c0_i32_1 = arith.constant 0 : i32
    return %c0_i32, %c0_i32_0 : i32, i32
  }
  func.func @transform_3(%arg0: i32, %arg1: i32) -> (i32, i32) {
    %c0_i32 = arith.constant 0 : i32
    %c0_i32_0 = arith.constant 0 : i32
    %c0_i32_1 = arith.constant 0 : i32
    return %c0_i32, %c0_i32_0 : i32, i32
  }
  func.func @transform_4(%arg0: i32, %arg1: i32) -> (i32, i32, i32) {
    %c0_i32 = arith.constant 0 : i32
    %c0_i32_0 = arith.constant 0 : i32
    return %arg1, %arg0, %c0_i32 : i32, i32, i32
  }
}

</mosaic_0001>

<llo_original>
// kernel: tpu_custom_call.1
$region0: #{tpu_custom_call.1}
  #allocation0 [shape = 'u32[]', space=smem, size = 0x4, offset = 0x4, fixed_abs, tag = 'smem constant byte address 0x4 - core index']
  #allocation1 [shape = 'u32[72,128]{1,0:T(1,128)}', space=vmem, size = 0x9000, scoped, tag = 'internal scratch']
  #allocation2 [shape = 'f32[8,8,512]{2,1,0:T(8,128)}', space=vmem, size = 0x20000, scoped, tag = 'scratch operand']
  #allocation3 [shape = 'f32[8,128]{1,0:T(8,128)}', space=vmem, size = 0x1000, scoped, tag = 'scratch operand']
  #allocation4 [shape = 'f32[8,128]{1,0:T(8,128)}', space=vmem, size = 0x1000, scoped, tag = 'scratch operand']
  %s0 = inlined_call_operand.hbm [shape: f32[8,8,16], index: 0, kind: input, shape index: {}]
  %s1 = inlined_call_operand.hbm [shape: bf16[16,512], index: 1, kind: input, shape index: {}]
  %s2 = inlined_call_operand.hbm [shape: bf16[128,512], index: 2, kind: input, shape index: {}]
  %s3 = inlined_call_operand.hbm [shape: f32[1,512], index: 3, kind: input, shape index: {}]
  %s4 = inlined_call_operand.hbm [shape: bf16[8,8,128], index: 4, kind: output, shape index: {}]
  %s5 = sld [smem:[#allocation0]]
  $region46: #{tpu_custom_call.1} parent=0
    _
  %s7 = ssub.s32 1, %s5
  %s8 = scalar_select 0, %s7, %s5
  $region1: #{tpu_custom_call.1} parent=0
    #allocation5 [shape = 'u8[32768]{0}', space=vmem, size = 0x8000, scoped, tag = 'input window, operand 0, single buffered']
    #allocation6 [shape = 's32[1]{0}', space=sflag, size = 0x4, scoped, tag = 'scoped memory for tpu_custom_call.1']
    #allocation7 [shape = 's32[1]{0}', space=sflag, size = 0x4, scoped, tag = 'scoped memory for tpu_custom_call.1']
    #allocation8 [shape = 'u8[16384]{0}', space=vmem, size = 0x4000, scoped, tag = 'input window, operand 1, single buffered']
    #allocation9 [shape = 's32[1]{0}', space=sflag, size = 0x4, scoped, tag = 'scoped memory for tpu_custom_call.1']
    #allocation10 [shape = 'u8[131072]{0}', space=vmem, size = 0x20000, scoped, tag = 'input window, operand 2, single buffered']
    #allocation11 [shape = 'u8[2048]{0}', space=vmem, size = 0x800, scoped, tag = 'input window, operand 3, single buffered']
    #allocation12 [shape = 's32[1]{0}', space=sflag, size = 0x4, scoped, tag = 'scoped memory for tpu_custom_call.1']
    #allocation13 [shape = 'u8[16384]{0}', space=vmem, size = 0x4000, scoped, tag = 'output window, operand 0, single buffered']
    %9 = vsyncpa [#allocation6], 0
    %10 = vsyncpa [#allocation9], 0
    %11 = vsyncpa [#allocation12], 0
    %12 = vsyncpa [#allocation7], 0
    // Predicated region
    $region2: #{tpu_custom_call.1} parent=1 // pred_check
      _
    $region3: #{tpu_custom_call.1} parent=1 // pred_check_branch
      %14 = sbr.rel (0) target = $region5
    $region4: #{tpu_custom_call.1} parent=1 // pred_region
      %16 = vsyncadd [#allocation6], 0
      %s17 = sshll.u32 %s0, 4
      %s18 = int_to_ptr.hbm [resolvable:$true] %s17
      %s19 = sshll.u32 [#allocation5], 4
      %s20 = int_to_ptr.vmem [resolvable:$true] %s19
      %25 = dma.hbm_to_vmem [thread:$0]  %s18, 1024, %s20, [#allocation6], 128, 128, 8
    $region5: #{tpu_custom_call.1} parent=1 // pred_fallthru
      _
    // Predicated region
    $region6: #{tpu_custom_call.1} parent=1 // pred_check
      _
    $region7: #{tpu_custom_call.1} parent=1 // pred_check_branch
      %27 = sbr.rel (0) target = $region9
    $region8: #{tpu_custom_call.1} parent=1 // pred_region
      %29 = vsyncadd [#allocation9], 0
      %s30 = sshll.u32 %s1, 4
      %s31 = int_to_ptr.hbm [resolvable:$true] %s30
      %s32 = sshll.u32 [#allocation8], 4
      %s33 = int_to_ptr.vmem [resolvable:$true] %s32
      %38 = dma.hbm_to_vmem [thread:$0]  %s31, 512, %s33, [#allocation9], 256, 256, 16
    $region9: #{tpu_custom_call.1} parent=1 // pred_fallthru
      _
    // Predicated region
    $region10: #{tpu_custom_call.1} parent=1 // pred_check
      _
    $region11: #{tpu_custom_call.1} parent=1 // pred_check_branch
      %40 = sbr.rel (0) target = $region13
    $region12: #{tpu_custom_call.1} parent=1 // pred_region
      %42 = vsyncadd [#allocation9], 0
      %s43 = sshll.u32 %s2, 4
      %s44 = int_to_ptr.hbm [resolvable:$true] %s43
      %s45 = sshll.u32 [#allocation10], 4
      %s46 = int_to_ptr.vmem [resolvable:$true] %s45
      %51 = dma.hbm_to_vmem [thread:$0]  %s44, 4096, %s46, [#allocation9], 256, 256, 16
    $region13: #{tpu_custom_call.1} parent=1 // pred_fallthru
      _
    // Predicated region
    $region14: #{tpu_custom_call.1} parent=1 // pred_check
      _
    $region15: #{tpu_custom_call.1} parent=1 // pred_check_branch
      %53 = sbr.rel (0) target = $region17
    $region16: #{tpu_custom_call.1} parent=1 // pred_region
      %55 = vsyncadd [#allocation12], 0
      %s57 = sshll.u32 %s3, 4
      %s58 = int_to_ptr.hbm [resolvable:$true] %s57
      %s59 = sshll.u32 [#allocation11], 4
      %s60 = int_to_ptr.vmem [resolvable:$true] %s59
      %62 = dma.hbm_to_vmem [thread:$0]  %s58, 64, %s60, [#allocation12]
    $region17: #{tpu_custom_call.1} parent=1 // pred_fallthru
      _
    // Predicated region
    $region18: #{tpu_custom_call.1} parent=1 // pred_check
      _
    $region19: #{tpu_custom_call.1} parent=1 // pred_check_branch
      %64 = sbr.rel (0) target = $region21
    $region20: #{tpu_custom_call.1} parent=1 // pred_region
      %66 = dma.done [#allocation6], 1024
    $region21: #{tpu_custom_call.1} parent=1 // pred_fallthru
      _
    // Predicated region
    $region22: #{tpu_custom_call.1} parent=1 // pred_check
      _
    $region23: #{tpu_custom_call.1} parent=1 // pred_check_branch
      %68 = sbr.rel (0) target = $region25
    $region24: #{tpu_custom_call.1} parent=1 // pred_region
      %70 = dma.done [#allocation9], 512
    $region25: #{tpu_custom_call.1} parent=1 // pred_fallthru
      _
    // Predicated region
    $region26: #{tpu_custom_call.1} parent=1 // pred_check
      _
    $region27: #{tpu_custom_call.1} parent=1 // pred_check_branch
      %72 = sbr.rel (0) target = $region29
    $region28: #{tpu_custom_call.1} parent=1 // pred_region
      %74 = dma.done [#allocation9], 4096
    $region29: #{tpu_custom_call.1} parent=1 // pred_fallthru
      _
    // Predicated region
    $region30: #{tpu_custom_call.1} parent=1 // pred_check
      _
    $region31: #{tpu_custom_call.1} parent=1 // pred_check_branch
      %76 = sbr.rel (0) target = $region33
    $region32: #{tpu_custom_call.1} parent=1 // pred_region
      %78 = dma.done [#allocation12], 64
    $region33: #{tpu_custom_call.1} parent=1 // pred_fallthru
      _
    %p80 = scmp.eq.s32.totalorder 0, 0
    // Predicated region
    $region34: #{tpu_custom_call.1} parent=1 // pred_check
      %p81 = pneg %p80
    $region35: #{tpu_custom_call.1} parent=1 // pred_check_branch
      %83 = sbr.rel (%p81) target = $region37
    $region36: #{tpu_custom_call.1} parent=1 // pred_region
      %84 = vst [vmem:[#allocation3] sm:$0xff] 0.0
      %85 = vst [vmem:[#allocation4] sm:$0xff] 0.0
    $region37: #{tpu_custom_call.1} parent=1 // pred_fallthru
      _
    %v86 = vld [vmem:[#allocation8] sm:$0xff]
    %v87 = vld [vmem:[#allocation8 + $0x8] sm:$0xff]
    %v88 = vld [vmem:[#allocation8 + $0x10] sm:$0xff]
    %v89 = vld [vmem:[#allocation8 + $0x18] sm:$0xff]
    %v90 = vld [vmem:[#allocation10] sm:$0xff]
    %v91 = vld [vmem:[#allocation10 + $0x8] sm:$0xff]
    %v92 = vld [vmem:[#allocation10 + $0x10] sm:$0xff]
    %v93 = vld [vmem:[#allocation10 + $0x18] sm:$0xff]
    %v94 = vld [vmem:[#allocation10 + $0x20] sm:$0xff]
    %v95 = vld [vmem:[#allocation10 + $0x28] sm:$0xff]
    %v96 = vld [vmem:[#allocation10 + $0x30] sm:$0xff]
    %v97 = vld [vmem:[#allocation10 + $0x38] sm:$0xff]
    %v98 = vld [vmem:[#allocation10 + $0x40] sm:$0xff]
    %v99 = vld [vmem:[#allocation10 + $0x48] sm:$0xff]
    %v100 = vld [vmem:[#allocation10 + $0x50] sm:$0xff]
    %v101 = vld [vmem:[#allocation10 + $0x58] sm:$0xff]
    %v102 = vld [vmem:[#allocation10 + $0x60] sm:$0xff]
    %v103 = vld [vmem:[#allocation10 + $0x68] sm:$0xff]
    %v104 = vld [vmem:[#allocation10 + $0x70] sm:$0xff]
    %v105 = vld [vmem:[#allocation10 + $0x78] sm:$0xff]
    %v106 = vld [vmem:[#allocation10 + $0x80] sm:$0xff]
    %v107 = vld [vmem:[#allocation10 + $0x88] sm:$0xff]
    %v108 = vld [vmem:[#allocation10 + $0x90] sm:$0xff]
    %v109 = vld [vmem:[#allocation10 + $0x98] sm:$0xff]
    %v110 = vld [vmem:[#allocation10 + $0xa0] sm:$0xff]
    %v111 = vld [vmem:[#allocation10 + $0xa8] sm:$0xff]
    %v112 = vld [vmem:[#allocation10 + $0xb0] sm:$0xff]
    %v113 = vld [vmem:[#allocation10 + $0xb8] sm:$0xff]
    %v114 = vld [vmem:[#allocation10 + $0xc0] sm:$0xff]
    %v115 = vld [vmem:[#allocation10 + $0xc8] sm:$0xff]
    %v116 = vld [vmem:[#allocation10 + $0xd0] sm:$0xff]
    %v117 = vld [vmem:[#allocation10 + $0xd8] sm:$0xff]
    %v118 = vld [vmem:[#allocation10 + $0xe0] sm:$0xff]
    %v119 = vld [vmem:[#allocation10 + $0xe8] sm:$0xff]
    %v120 = vld [vmem:[#allocation10 + $0xf0] sm:$0xff]
    %v121 = vld [vmem:[#allocation10 + $0xf8] sm:$0xff]
    %v122 = vld [vmem:[#allocation11] sm:$0xf]
    %v123 = vld [vmem:[#allocation5] sm:$0xff]
    %v124 = vpack.c.bf16 %v123, %v123
    %v126 = vperm.slane %v122, 0
    %v127 = vperm.slane %v122, 1
    %v128 = vperm.slane %v122, 2
    %v129 = vperm.slane %v122, 3
    %v138 = vunpack.c.l.b16 %v86
    %v139 = vunpack.c.h.b16 %v86
    %v140 = vunpack.c.l.b16 %v87
    %v141 = vunpack.c.h.b16 %v87
    %v142 = vunpack.c.l.b16 %v88
    %v143 = vunpack.c.h.b16 %v88
    %v144 = vunpack.c.l.b16 %v89
    %v145 = vunpack.c.h.b16 %v89
    %v146 = vpack.c.b16 %v142, %v138
    %v147 = vpack.c.b16 %v143, %v139
    %v148 = vpack.c.b16 %v144, %v140
    %v149 = vpack.c.b16 %v145, %v141
    %vm154 = vcmask 130048
    %v156 = vsel %vm154, %v124, 0
    %158 = vmatpush.bf16.msra.mxu0 0
    %159 = vmatpush.bf16.msra.mxu0 0
    %160 = vmatpush.bf16.msra.mxu0 0
    %161 = vmatpush.bf16.msra.mxu0 0
    %162 = vmatpush.bf16.msra.mxu0 0
    %163 = vmatpush.bf16.msra.mxu0 0
    %164 = vmatpush.bf16.msra.mxu0 0
    %165 = vmatpush.bf16.msra.mxu0 %v146
    %166 = vmatmul.bf16.gmra.mxu0 %v156
    %v167 = vpop.f32.mrf.mxu0
    %v168 = vadd.f32 %v126, %v167
    %v169 = vpop.f32.mrf.mxu0
    %170 = vdwg.mxu0
    %171 = vmatpush.bf16.msra.mxu0 0
    %172 = vmatpush.bf16.msra.mxu0 0
    %173 = vmatpush.bf16.msra.mxu0 0
    %174 = vmatpush.bf16.msra.mxu0 0
    %175 = vmatpush.bf16.msra.mxu0 0
    %176 = vmatpush.bf16.msra.mxu0 0
    %177 = vmatpush.bf16.msra.mxu0 0
    %178 = vmatpush.bf16.msra.mxu0 %v147
    %179 = vmatmul.bf16.gmra.mxu0 %v156
    %v180 = vpop.f32.mrf.mxu0
    %v181 = vadd.f32 %v127, %v180
    %v182 = vpop.f32.mrf.mxu0
    %183 = vdwg.mxu0
    %184 = vmatpush.bf16.msra.mxu0 0
    %185 = vmatpush.bf16.msra.mxu0 0
    %186 = vmatpush.bf16.msra.mxu0 0
    %187 = vmatpush.bf16.msra.mxu0 0
    %188 = vmatpush.bf16.msra.mxu0 0
    %189 = vmatpush.bf16.msra.mxu0 0
    %190 = vmatpush.bf16.msra.mxu0 0
    %191 = vmatpush.bf16.msra.mxu0 %v148
    %192 = vmatmul.bf16.gmra.mxu0 %v156
    %v193 = vpop.f32.mrf.mxu0
    %v194 = vadd.f32 %v128, %v193
    %v195 = vpop.f32.mrf.mxu0
    %196 = vdwg.mxu0
    %197 = vmatpush.bf16.msra.mxu0 0
    %198 = vmatpush.bf16.msra.mxu0 0
    %199 = vmatpush.bf16.msra.mxu0 0
    %200 = vmatpush.bf16.msra.mxu0 0
    %201 = vmatpush.bf16.msra.mxu0 0
    %202 = vmatpush.bf16.msra.mxu0 0
    %203 = vmatpush.bf16.msra.mxu0 0
    %204 = vmatpush.bf16.msra.mxu0 %v149
    %205 = vmatmul.bf16.gmra.mxu0 %v156
    %v206 = vpop.f32.mrf.mxu0
    %v207 = vadd.f32 %v129, %v206
    %v208 = vpop.f32.mrf.mxu0
    %209 = vdwg.mxu0
    %210 = vst [vmem:[#allocation2] sm:$0xff] %v168
    %211 = vst [vmem:[#allocation2 + $0x8] sm:$0xff] %v181
    %212 = vst [vmem:[#allocation2 + $0x10] sm:$0xff] %v194
    %213 = vst [vmem:[#allocation2 + $0x18] sm:$0xff] %v207
    %s214 = scalar_lea.vmem [#allocation5], 8
    %v215 = vld [vmem:[%s214] sm:$0xff]
    %v216 = vpack.c.bf16 %v215, %v215
    %v218 = vsel %vm154, %v216, 0
    %220 = vmatpush.bf16.msra.mxu0 0
    %221 = vmatpush.bf16.msra.mxu0 0
    %222 = vmatpush.bf16.msra.mxu0 0
    %223 = vmatpush.bf16.msra.mxu0 0
    %224 = vmatpush.bf16.msra.mxu0 0
    %225 = vmatpush.bf16.msra.mxu0 0
    %226 = vmatpush.bf16.msra.mxu0 0
    %227 = vmatpush.bf16.msra.mxu0 %v146
    %228 = vmatmul.bf16.gmra.mxu0 %v218
    %v229 = vpop.f32.mrf.mxu0
    %v230 = vadd.f32 %v126, %v229
    %v231 = vpop.f32.mrf.mxu0
    %232 = vdwg.mxu0
    %233 = vmatpush.bf16.msra.mxu0 0
    %234 = vmatpush.bf16.msra.mxu0 0
    %235 = vmatpush.bf16.msra.mxu0 0
    %236 = vmatpush.bf16.msra.mxu0 0
    %237 = vmatpush.bf16.msra.mxu0 0
    %238 = vmatpush.bf16.msra.mxu0 0
    %239 = vmatpush.bf16.msra.mxu0 0
    %240 = vmatpush.bf16.msra.mxu0 %v147
    %241 = vmatmul.bf16.gmra.mxu0 %v218
    %v242 = vpop.f32.mrf.mxu0
    %v243 = vadd.f32 %v127, %v242
    %v244 = vpop.f32.mrf.mxu0
    %245 = vdwg.mxu0
    %246 = vmatpush.bf16.msra.mxu0 0
    %247 = vmatpush.bf16.msra.mxu0 0
    %248 = vmatpush.bf16.msra.mxu0 0
    %249 = vmatpush.bf16.msra.mxu0 0
    %250 = vmatpush.bf16.msra.mxu0 0
    %251 = vmatpush.bf16.msra.mxu0 0
    %252 = vmatpush.bf16.msra.mxu0 0
    %253 = vmatpush.bf16.msra.mxu0 %v148
    %254 = vmatmul.bf16.gmra.mxu0 %v218
    %v255 = vpop.f32.mrf.mxu0
    %v256 = vadd.f32 %v128, %v255
    %v257 = vpop.f32.mrf.mxu0
    %258 = vdwg.mxu0
    %259 = vmatpush.bf16.msra.mxu0 0
    %260 = vmatpush.bf16.msra.mxu0 0
    %261 = vmatpush.bf16.msra.mxu0 0
    %262 = vmatpush.bf16.msra.mxu0 0
    %263 = vmatpush.bf16.msra.mxu0 0
    %264 = vmatpush.bf16.msra.mxu0 0
    %265 = vmatpush.bf16.msra.mxu0 0
    %266 = vmatpush.bf16.msra.mxu0 %v149
    %267 = vmatmul.bf16.gmra.mxu0 %v218
    %v268 = vpop.f32.mrf.mxu0
    %v269 = vadd.f32 %v129, %v268
    %v270 = vpop.f32.mrf.mxu0
    %271 = vdwg.mxu0
    %s272 = scalar_lea.vmem [#allocation2], 32
    %273 = vst [vmem:[%s272] sm:$0xff] %v230
    %274 = vst [vmem:[%s272 + $0x8] sm:$0xff] %v243
    %275 = vst [vmem:[%s272 + $0x10] sm:$0xff] %v256
    %276 = vst [vmem:[%s272 + $0x18] sm:$0xff] %v269
    %s277 = scalar_lea.vmem [#allocation5], 16
    %v278 = vld [vmem:[%s277] sm:$0xff]
    %v279 = vpack.c.bf16 %v278, %v278
    %v281 = vsel %vm154, %v279, 0
    %283 = vmatpush.bf16.msra.mxu0 0
    %284 = vmatpush.bf16.msra.mxu0 0
    %285 = vmatpush.bf16.msra.mxu0 0
    %286 = vmatpush.bf16.msra.mxu0 0
    %287 = vmatpush.bf16.msra.mxu0 0
    %288 = vmatpush.bf16.msra.mxu0 0
    %289 = vmatpush.bf16.msra.mxu0 0
    %290 = vmatpush.bf16.msra.mxu0 %v146
    %291 = vmatmul.bf16.gmra.mxu0 %v281
    %v292 = vpop.f32.mrf.mxu0
    %v293 = vadd.f32 %v126, %v292
    %v294 = vpop.f32.mrf.mxu0
    %295 = vdwg.mxu0
    %296 = vmatpush.bf16.msra.mxu0 0
    %297 = vmatpush.bf16.msra.mxu0 0
    %298 = vmatpush.bf16.msra.mxu0 0
    %299 = vmatpush.bf16.msra.mxu0 0
    %300 = vmatpush.bf16.msra.mxu0 0
    %301 = vmatpush.bf16.msra.mxu0 0
    %302 = vmatpush.bf16.msra.mxu0 0
    %303 = vmatpush.bf16.msra.mxu0 %v147
    %304 = vmatmul.bf16.gmra.mxu0 %v281
    %v305 = vpop.f32.mrf.mxu0
    %v306 = vadd.f32 %v127, %v305
    %v307 = vpop.f32.mrf.mxu0
    %308 = vdwg.mxu0
    %309 = vmatpush.bf16.msra.mxu0 0
    %310 = vmatpush.bf16.msra.mxu0 0
    %311 = vmatpush.bf16.msra.mxu0 0
    %312 = vmatpush.bf16.msra.mxu0 0
    %313 = vmatpush.bf16.msra.mxu0 0
    %314 = vmatpush.bf16.msra.mxu0 0
    %315 = vmatpush.bf16.msra.mxu0 0
    %316 = vmatpush.bf16.msra.mxu0 %v148
    %317 = vmatmul.bf16.gmra.mxu0 %v281
    %v318 = vpop.f32.mrf.mxu0
    %v319 = vadd.f32 %v128, %v318
    %v320 = vpop.f32.mrf.mxu0
    %321 = vdwg.mxu0
    %322 = vmatpush.bf16.msra.mxu0 0
    %323 = vmatpush.bf16.msra.mxu0 0
    %324 = vmatpush.bf16.msra.mxu0 0
    %325 = vmatpush.bf16.msra.mxu0 0
    %326 = vmatpush.bf16.msra.mxu0 0
    %327 = vmatpush.bf16.msra.mxu0 0
    %328 = vmatpush.bf16.msra.mxu0 0
    %329 = vmatpush.bf16.msra.mxu0 %v149
    %330 = vmatmul.bf16.gmra.mxu0 %v281
    %v331 = vpop.f32.mrf.mxu0
    %v332 = vadd.f32 %v129, %v331
    %v333 = vpop.f32.mrf.mxu0
    %334 = vdwg.mxu0
    %s335 = scalar_lea.vmem [#allocation2], 64
    %336 = vst [vmem:[%s335] sm:$0xff] %v293
    %337 = vst [vmem:[%s335 + $0x8] sm:$0xff] %v306
    %338 = vst [vmem:[%s335 + $0x10] sm:$0xff] %v319
    %339 = vst [vmem:[%s335 + $0x18] sm:$0xff] %v332
    %s340 = scalar_lea.vmem [#allocation5], 24
    %v341 = vld [vmem:[%s340] sm:$0xff]
    %v342 = vpack.c.bf16 %v341, %v341
    %v344 = vsel %vm154, %v342, 0
    %346 = vmatpush.bf16.msra.mxu0 0
    %347 = vmatpush.bf16.msra.mxu0 0
    %348 = vmatpush.bf16.msra.mxu0 0
    %349 = vmatpush.bf16.msra.mxu0 0
    %350 = vmatpush.bf16.msra.mxu0 0
    %351 = vmatpush.bf16.msra.mxu0 0
    %352 = vmatpush.bf16.msra.mxu0 0
    %353 = vmatpush.bf16.msra.mxu0 %v146
    %354 = vmatmul.bf16.gmra.mxu0 %v344
    %v355 = vpop.f32.mrf.mxu0
    %v356 = vadd.f32 %v126, %v355
    %v357 = vpop.f32.mrf.mxu0
    %358 = vdwg.mxu0
    %359 = vmatpush.bf16.msra.mxu0 0
    %360 = vmatpush.bf16.msra.mxu0 0
    %361 = vmatpush.bf16.msra.mxu0 0
    %362 = vmatpush.bf16.msra.mxu0 0
    %363 = vmatpush.bf16.msra.mxu0 0
    %364 = vmatpush.bf16.msra.mxu0 0
    %365 = vmatpush.bf16.msra.mxu0 0
    %366 = vmatpush.bf16.msra.mxu0 %v147
    %367 = vmatmul.bf16.gmra.mxu0 %v344
    %v368 = vpop.f32.mrf.mxu0
    %v369 = vadd.f32 %v127, %v368
    %v370 = vpop.f32.mrf.mxu0
    %371 = vdwg.mxu0
    %372 = vmatpush.bf16.msra.mxu0 0
    %373 = vmatpush.bf16.msra.mxu0 0
    %374 = vmatpush.bf16.msra.mxu0 0
    %375 = vmatpush.bf16.msra.mxu0 0
    %376 = vmatpush.bf16.msra.mxu0 0
    %377 = vmatpush.bf16.msra.mxu0 0
    %378 = vmatpush.bf16.msra.mxu0 0
    %379 = vmatpush.bf16.msra.mxu0 %v148
    %380 = vmatmul.bf16.gmra.mxu0 %v344
    %v381 = vpop.f32.mrf.mxu0
    %v382 = vadd.f32 %v128, %v381
    %v383 = vpop.f32.mrf.mxu0
    %384 = vdwg.mxu0
    %385 = vmatpush.bf16.msra.mxu0 0
    %386 = vmatpush.bf16.msra.mxu0 0
    %387 = vmatpush.bf16.msra.mxu0 0
    %388 = vmatpush.bf16.msra.mxu0 0
    %389 = vmatpush.bf16.msra.mxu0 0
    %390 = vmatpush.bf16.msra.mxu0 0
    %391 = vmatpush.bf16.msra.mxu0 0
    %392 = vmatpush.bf16.msra.mxu0 %v149
    %393 = vmatmul.bf16.gmra.mxu0 %v344
    %v394 = vpop.f32.mrf.mxu0
    %v395 = vadd.f32 %v129, %v394
    %v396 = vpop.f32.mrf.mxu0
    %397 = vdwg.mxu0
    %s398 = scalar_lea.vmem [#allocation2], 96
    %399 = vst [vmem:[%s398] sm:$0xff] %v356
    %400 = vst [vmem:[%s398 + $0x8] sm:$0xff] %v369
    %401 = vst [vmem:[%s398 + $0x10] sm:$0xff] %v382
    %402 = vst [vmem:[%s398 + $0x18] sm:$0xff] %v395
    %s403 = scalar_lea.vmem [#allocation5], 32
    %v404 = vld [vmem:[%s403] sm:$0xff]
    %v405 = vpack.c.bf16 %v404, %v404
    %v407 = vsel %vm154, %v405, 0
    %409 = vmatpush.bf16.msra.mxu0 0
    %410 = vmatpush.bf16.msra.mxu0 0
    %411 = vmatpush.bf16.msra.mxu0 0
    %412 = vmatpush.bf16.msra.mxu0 0
    %413 = vmatpush.bf16.msra.mxu0 0
    %414 = vmatpush.bf16.msra.mxu0 0
    %415 = vmatpush.bf16.msra.mxu0 0
    %416 = vmatpush.bf16.msra.mxu0 %v146
    %417 = vmatmul.bf16.gmra.mxu0 %v407
    %v418 = vpop.f32.mrf.mxu0
    %v419 = vadd.f32 %v126, %v418
    %v420 = vpop.f32.mrf.mxu0
    %421 = vdwg.mxu0
    %422 = vmatpush.bf16.msra.mxu0 0
    %423 = vmatpush.bf16.msra.mxu0 0
    %424 = vmatpush.bf16.msra.mxu0 0
    %425 = vmatpush.bf16.msra.mxu0 0
    %426 = vmatpush.bf16.msra.mxu0 0
    %427 = vmatpush.bf16.msra.mxu0 0
    %428 = vmatpush.bf16.msra.mxu0 0
    %429 = vmatpush.bf16.msra.mxu0 %v147
    %430 = vmatmul.bf16.gmra.mxu0 %v407
    %v431 = vpop.f32.mrf.mxu0
    %v432 = vadd.f32 %v127, %v431
    %v433 = vpop.f32.mrf.mxu0
    %434 = vdwg.mxu0
    %435 = vmatpush.bf16.msra.mxu0 0
    %436 = vmatpush.bf16.msra.mxu0 0
    %437 = vmatpush.bf16.msra.mxu0 0
    %438 = vmatpush.bf16.msra.mxu0 0
    %439 = vmatpush.bf16.msra.mxu0 0
    %440 = vmatpush.bf16.msra.mxu0 0
    %441 = vmatpush.bf16.msra.mxu0 0
    %442 = vmatpush.bf16.msra.mxu0 %v148
    %443 = vmatmul.bf16.gmra.mxu0 %v407
    %v444 = vpop.f32.mrf.mxu0
    %v445 = vadd.f32 %v128, %v444
    %v446 = vpop.f32.mrf.mxu0
    %447 = vdwg.mxu0
    %448 = vmatpush.bf16.msra.mxu0 0
    %449 = vmatpush.bf16.msra.mxu0 0
    %450 = vmatpush.bf16.msra.mxu0 0
    %451 = vmatpush.bf16.msra.mxu0 0
    %452 = vmatpush.bf16.msra.mxu0 0
    %453 = vmatpush.bf16.msra.mxu0 0
    %454 = vmatpush.bf16.msra.mxu0 0
    %455 = vmatpush.bf16.msra.mxu0 %v149
    %456 = vmatmul.bf16.gmra.mxu0 %v407
    %v457 = vpop.f32.mrf.mxu0
    %v458 = vadd.f32 %v129, %v457
    %v459 = vpop.f32.mrf.mxu0
    %460 = vdwg.mxu0
    %s461 = scalar_lea.vmem [#allocation2], 128
    %462 = vst [vmem:[%s461] sm:$0xff] %v419
    %463 = vst [vmem:[%s461 + $0x8] sm:$0xff] %v432
    %464 = vst [vmem:[%s461 + $0x10] sm:$0xff] %v445
    %465 = vst [vmem:[%s461 + $0x18] sm:$0xff] %v458
    %s466 = scalar_lea.vmem [#allocation5], 40
    %v467 = vld [vmem:[%s466] sm:$0xff]
    %v468 = vpack.c.bf16 %v467, %v467
    %v470 = vsel %vm154, %v468, 0
    %472 = vmatpush.bf16.msra.mxu0 0
    %473 = vmatpush.bf16.msra.mxu0 0
    %474 = vmatpush.bf16.msra.mxu0 0
    %475 = vmatpush.bf16.msra.mxu0 0
    %476 = vmatpush.bf16.msra.mxu0 0
    %477 = vmatpush.bf16.msra.mxu0 0
    %478 = vmatpush.bf16.msra.mxu0 0
    %479 = vmatpush.bf16.msra.mxu0 %v146
    %480 = vmatmul.bf16.gmra.mxu0 %v470
    %v481 = vpop.f32.mrf.mxu0
    %v482 = vadd.f32 %v126, %v481
    %v483 = vpop.f32.mrf.mxu0
    %484 = vdwg.mxu0
    %485 = vmatpush.bf16.msra.mxu0 0
    %486 = vmatpush.bf16.msra.mxu0 0
    %487 = vmatpush.bf16.msra.mxu0 0
    %488 = vmatpush.bf16.msra.mxu0 0
    %489 = vmatpush.bf16.msra.mxu0 0
    %490 = vmatpush.bf16.msra.mxu0 0
    %491 = vmatpush.bf16.msra.mxu0 0
    %492 = vmatpush.bf16.msra.mxu0 %v147
    %493 = vmatmul.bf16.gmra.mxu0 %v470
    %v494 = vpop.f32.mrf.mxu0
    %v495 = vadd.f32 %v127, %v494
    %v496 = vpop.f32.mrf.mxu0
    %497 = vdwg.mxu0
    %498 = vmatpush.bf16.msra.mxu0 0
    %499 = vmatpush.bf16.msra.mxu0 0
    %500 = vmatpush.bf16.msra.mxu0 0
    %501 = vmatpush.bf16.msra.mxu0 0
    %502 = vmatpush.bf16.msra.mxu0 0
    %503 = vmatpush.bf16.msra.mxu0 0
    %504 = vmatpush.bf16.msra.mxu0 0
    %505 = vmatpush.bf16.msra.mxu0 %v148
    %506 = vmatmul.bf16.gmra.mxu0 %v470
    %v507 = vpop.f32.mrf.mxu0
    %v508 = vadd.f32 %v128, %v507
    %v509 = vpop.f32.mrf.mxu0
    %510 = vdwg.mxu0
    %511 = vmatpush.bf16.msra.mxu0 0
    %512 = vmatpush.bf16.msra.mxu0 0
    %513 = vmatpush.bf16.msra.mxu0 0
    %514 = vmatpush.bf16.msra.mxu0 0
    %515 = vmatpush.bf16.msra.mxu0 0
    %516 = vmatpush.bf16.msra.mxu0 0
    %517 = vmatpush.bf16.msra.mxu0 0
    %518 = vmatpush.bf16.msra.mxu0 %v149
    %519 = vmatmul.bf16.gmra.mxu0 %v470
    %v520 = vpop.f32.mrf.mxu0
    %v521 = vadd.f32 %v129, %v520
    %v522 = vpop.f32.mrf.mxu0
    %523 = vdwg.mxu0
    %s524 = scalar_lea.vmem [#allocation2], 160
    %525 = vst [vmem:[%s524] sm:$0xff] %v482
    %526 = vst [vmem:[%s524 + $0x8] sm:$0xff] %v495
    %527 = vst [vmem:[%s524 + $0x10] sm:$0xff] %v508
    %528 = vst [vmem:[%s524 + $0x18] sm:$0xff] %v521
    %s529 = scalar_lea.vmem [#allocation5], 48
    %v530 = vld [vmem:[%s529] sm:$0xff]
    %v531 = vpack.c.bf16 %v530, %v530
    %v533 = vsel %vm154, %v531, 0
    %535 = vmatpush.bf16.msra.mxu0 0
    %536 = vmatpush.bf16.msra.mxu0 0
    %537 = vmatpush.bf16.msra.mxu0 0
    %538 = vmatpush.bf16.msra.mxu0 0
    %539 = vmatpush.bf16.msra.mxu0 0
    %540 = vmatpush.bf16.msra.mxu0 0
    %541 = vmatpush.bf16.msra.mxu0 0
    %542 = vmatpush.bf16.msra.mxu0 %v146
    %543 = vmatmul.bf16.gmra.mxu0 %v533
    %v544 = vpop.f32.mrf.mxu0
    %v545 = vadd.f32 %v126, %v544
    %v546 = vpop.f32.mrf.mxu0
    %547 = vdwg.mxu0
    %548 = vmatpush.bf16.msra.mxu0 0
    %549 = vmatpush.bf16.msra.mxu0 0
    %550 = vmatpush.bf16.msra.mxu0 0
    %551 = vmatpush.bf16.msra.mxu0 0
    %552 = vmatpush.bf16.msra.mxu0 0
    %553 = vmatpush.bf16.msra.mxu0 0
    %554 = vmatpush.bf16.msra.mxu0 0
    %555 = vmatpush.bf16.msra.mxu0 %v147
    %556 = vmatmul.bf16.gmra.mxu0 %v533
    %v557 = vpop.f32.mrf.mxu0
    %v558 = vadd.f32 %v127, %v557
    %v559 = vpop.f32.mrf.mxu0
    %560 = vdwg.mxu0
    %561 = vmatpush.bf16.msra.mxu0 0
    %562 = vmatpush.bf16.msra.mxu0 0
    %563 = vmatpush.bf16.msra.mxu0 0
    %564 = vmatpush.bf16.msra.mxu0 0
    %565 = vmatpush.bf16.msra.mxu0 0
    %566 = vmatpush.bf16.msra.mxu0 0
    %567 = vmatpush.bf16.msra.mxu0 0
    %568 = vmatpush.bf16.msra.mxu0 %v148
    %569 = vmatmul.bf16.gmra.mxu0 %v533
    %v570 = vpop.f32.mrf.mxu0
    %v571 = vadd.f32 %v128, %v570
    %v572 = vpop.f32.mrf.mxu0
    %573 = vdwg.mxu0
    %574 = vmatpush.bf16.msra.mxu0 0
    %575 = vmatpush.bf16.msra.mxu0 0
    %576 = vmatpush.bf16.msra.mxu0 0
    %577 = vmatpush.bf16.msra.mxu0 0
    %578 = vmatpush.bf16.msra.mxu0 0
    %579 = vmatpush.bf16.msra.mxu0 0
    %580 = vmatpush.bf16.msra.mxu0 0
    %581 = vmatpush.bf16.msra.mxu0 %v149
    %582 = vmatmul.bf16.gmra.mxu0 %v533
    %v583 = vpop.f32.mrf.mxu0
    %v584 = vadd.f32 %v129, %v583
    %v585 = vpop.f32.mrf.mxu0
    %586 = vdwg.mxu0
    %s587 = scalar_lea.vmem [#allocation2], 192
    %588 = vst [vmem:[%s587] sm:$0xff] %v545
    %589 = vst [vmem:[%s587 + $0x8] sm:$0xff] %v558
    %590 = vst [vmem:[%s587 + $0x10] sm:$0xff] %v571
    %591 = vst [vmem:[%s587 + $0x18] sm:$0xff] %v584
    %s592 = scalar_lea.vmem [#allocation5], 56
    %v593 = vld [vmem:[%s592] sm:$0xff]
    %v594 = vpack.c.bf16 %v593, %v593
    %v596 = vsel %vm154, %v594, 0
    %598 = vmatpush.bf16.msra.mxu0 0
    %599 = vmatpush.bf16.msra.mxu0 0
    %600 = vmatpush.bf16.msra.mxu0 0
    %601 = vmatpush.bf16.msra.mxu0 0
    %602 = vmatpush.bf16.msra.mxu0 0
    %603 = vmatpush.bf16.msra.mxu0 0
    %604 = vmatpush.bf16.msra.mxu0 0
    %605 = vmatpush.bf16.msra.mxu0 %v146
    %606 = vmatmul.bf16.gmra.mxu0 %v596
    %v607 = vpop.f32.mrf.mxu0
    %v608 = vadd.f32 %v126, %v607
    %v609 = vpop.f32.mrf.mxu0
    %610 = vdwg.mxu0
    %611 = vmatpush.bf16.msra.mxu0 0
    %612 = vmatpush.bf16.msra.mxu0 0
    %613 = vmatpush.bf16.msra.mxu0 0
    %614 = vmatpush.bf16.msra.mxu0 0
    %615 = vmatpush.bf16.msra.mxu0 0
    %616 = vmatpush.bf16.msra.mxu0 0
    %617 = vmatpush.bf16.msra.mxu0 0
    %618 = vmatpush.bf16.msra.mxu0 %v147
    %619 = vmatmul.bf16.gmra.mxu0 %v596
    %v620 = vpop.f32.mrf.mxu0
    %v621 = vadd.f32 %v127, %v620
    %v622 = vpop.f32.mrf.mxu0
    %623 = vdwg.mxu0
    %624 = vmatpush.bf16.msra.mxu0 0
    %625 = vmatpush.bf16.msra.mxu0 0
    %626 = vmatpush.bf16.msra.mxu0 0
    %627 = vmatpush.bf16.msra.mxu0 0
    %628 = vmatpush.bf16.msra.mxu0 0
    %629 = vmatpush.bf16.msra.mxu0 0
    %630 = vmatpush.bf16.msra.mxu0 0
    %631 = vmatpush.bf16.msra.mxu0 %v148
    %632 = vmatmul.bf16.gmra.mxu0 %v596
    %v633 = vpop.f32.mrf.mxu0
    %v634 = vadd.f32 %v128, %v633
    %v635 = vpop.f32.mrf.mxu0
    %636 = vdwg.mxu0
    %637 = vmatpush.bf16.msra.mxu0 0
    %638 = vmatpush.bf16.msra.mxu0 0
    %639 = vmatpush.bf16.msra.mxu0 0
    %640 = vmatpush.bf16.msra.mxu0 0
    %641 = vmatpush.bf16.msra.mxu0 0
    %642 = vmatpush.bf16.msra.mxu0 0
    %643 = vmatpush.bf16.msra.mxu0 0
    %644 = vmatpush.bf16.msra.mxu0 %v149
    %645 = vmatmul.bf16.gmra.mxu0 %v596
    %v646 = vpop.f32.mrf.mxu0
    %v647 = vadd.f32 %v129, %v646
    %v648 = vpop.f32.mrf.mxu0
    %649 = vdwg.mxu0
    %s650 = scalar_lea.vmem [#allocation2], 224
    %651 = vst [vmem:[%s650] sm:$0xff] %v608
    %652 = vst [vmem:[%s650 + $0x8] sm:$0xff] %v621
    %653 = vst [vmem:[%s650 + $0x10] sm:$0xff] %v634
    %654 = vst [vmem:[%s650 + $0x18] sm:$0xff] %v647
    %v655 = vld [vmem:[#allocation3] sm:$0xff]
    %v656 = vld [vmem:[#allocation4] sm:$0xff]
    %v657 = vld [vmem:[#allocation2] sm:$0xff]
    %v658 = vld [vmem:[#allocation2 + $0x8] sm:$0xff]
    %v659 = vld [vmem:[#allocation2 + $0x10] sm:$0xff]
    %v660 = vld [vmem:[#allocation2 + $0x18] sm:$0xff]
    %v661 = vpack.c.bf16 %v655, %v655
    %v694 = vunpack.c.l.b16 %v90
    %v695 = vunpack.c.h.b16 %v90
    %v696 = vunpack.c.l.b16 %v91
    %v697 = vunpack.c.h.b16 %v91
    %v698 = vunpack.c.l.b16 %v92
    %v699 = vunpack.c.h.b16 %v92
    %v700 = vunpack.c.l.b16 %v93
    %v701 = vunpack.c.h.b16 %v93
    %v702 = vunpack.c.l.b16 %v94
    %v703 = vunpack.c.h.b16 %v94
    %v704 = vunpack.c.l.b16 %v95
    %v705 = vunpack.c.h.b16 %v95
    %v706 = vunpack.c.l.b16 %v96
    %v707 = vunpack.c.h.b16 %v96
    %v708 = vunpack.c.l.b16 %v97
    %v709 = vunpack.c.h.b16 %v97
    %v710 = vunpack.c.l.b16 %v98
    %v711 = vunpack.c.h.b16 %v98
    %v712 = vunpack.c.l.b16 %v99
    %v713 = vunpack.c.h.b16 %v99
    %v714 = vunpack.c.l.b16 %v100
    %v715 = vunpack.c.h.b16 %v100
    %v716 = vunpack.c.l.b16 %v101
    %v717 = vunpack.c.h.b16 %v101
    %v718 = vunpack.c.l.b16 %v102
    %v719 = vunpack.c.h.b16 %v102
    %v720 = vunpack.c.l.b16 %v103
    %v721 = vunpack.c.h.b16 %v103
    %v722 = vunpack.c.l.b16 %v104
    %v723 = vunpack.c.h.b16 %v104
    %v724 = vunpack.c.l.b16 %v105
    %v725 = vunpack.c.h.b16 %v105
    %v726 = vunpack.c.l.b16 %v106
    %v727 = vunpack.c.h.b16 %v106
    %v728 = vunpack.c.l.b16 %v107
    %v729 = vunpack.c.h.b16 %v107
    %v730 = vunpack.c.l.b16 %v108
    %v731 = vunpack.c.h.b16 %v108
    %v732 = vunpack.c.l.b16 %v109
    %v733 = vunpack.c.h.b16 %v109
    %v734 = vunpack.c.l.b16 %v110
    %v735 = vunpack.c.h.b16 %v110
    %v736 = vunpack.c.l.b16 %v111
    %v737 = vunpack.c.h.b16 %v111
    %v738 = vunpack.c.l.b16 %v112
    %v739 = vunpack.c.h.b16 %v112
    %v740 = vunpack.c.l.b16 %v113
    %v741 = vunpack.c.h.b16 %v113
    %v742 = vunpack.c.l.b16 %v114
    %v743 = vunpack.c.h.b16 %v114
    %v744 = vunpack.c.l.b16 %v115
    %v745 = vunpack.c.h.b16 %v115
    %v746 = vunpack.c.l.b16 %v116
    %v747 = vunpack.c.h.b16 %v116
    %v748 = vunpack.c.l.b16 %v117
    %v749 = vunpack.c.h.b16 %v117
    %v750 = vunpack.c.l.b16 %v118
    %v751 = vunpack.c.h.b16 %v118
    %v752 = vunpack.c.l.b16 %v119
    %v753 = vunpack.c.h.b16 %v119
    %v754 = vunpack.c.l.b16 %v120
    %v755 = vunpack.c.h.b16 %v120
    %v756 = vunpack.c.l.b16 %v121
    %v757 = vunpack.c.h.b16 %v121
    %v758 = vpack.c.b16 %v698, %v694
    %v759 = vpack.c.b16 %v699, %v695
    %v760 = vpack.c.b16 %v700, %v696
    %v761 = vpack.c.b16 %v701, %v697
    %v762 = vpack.c.b16 %v706, %v702
    %v763 = vpack.c.b16 %v707, %v703
    %v764 = vpack.c.b16 %v708, %v704
    %v765 = vpack.c.b16 %v709, %v705
    %v766 = vpack.c.b16 %v714, %v710
    %v767 = vpack.c.b16 %v715, %v711
    %v768 = vpack.c.b16 %v716, %v712
    %v769 = vpack.c.b16 %v717, %v713
    %v770 = vpack.c.b16 %v722, %v718
    %v771 = vpack.c.b16 %v723, %v719
    %v772 = vpack.c.b16 %v724, %v720
    %v773 = vpack.c.b16 %v725, %v721
    %v774 = vpack.c.b16 %v730, %v726
    %v775 = vpack.c.b16 %v731, %v727
    %v776 = vpack.c.b16 %v732, %v728
    %v777 = vpack.c.b16 %v733, %v729
    %v778 = vpack.c.b16 %v738, %v734
    %v779 = vpack.c.b16 %v739, %v735
    %v780 = vpack.c.b16 %v740, %v736
    %v781 = vpack.c.b16 %v741, %v737
    %v782 = vpack.c.b16 %v746, %v742
    %v783 = vpack.c.b16 %v747, %v743
    %v784 = vpack.c.b16 %v748, %v744
    %v785 = vpack.c.b16 %v749, %v745
    %v786 = vpack.c.b16 %v754, %v750
    %v787 = vpack.c.b16 %v755, %v751
    %v788 = vpack.c.b16 %v756, %v752
    %v789 = vpack.c.b16 %v757, %v753
    %822 = vmatpush.bf16.msra.mxu0 %v786
    %823 = vmatpush.bf16.msra.mxu0 %v782
    %824 = vmatpush.bf16.msra.mxu0 %v778
    %825 = vmatpush.bf16.msra.mxu0 %v774
    %826 = vmatpush.bf16.msra.mxu0 %v770
    %827 = vmatpush.bf16.msra.mxu0 %v766
    %828 = vmatpush.bf16.msra.mxu0 %v762
    %829 = vmatpush.bf16.msra.mxu0 %v758
    %830 = vmatmul.bf16.gmra.mxu0 %v661
    %v831 = vpop.f32.mrf.mxu0
    %v832 = vadd.f32 0.0, %v831
    %v833 = vpop.f32.mrf.mxu0
    %834 = vdwg.mxu0
    %835 = vmatpush.bf16.msra.mxu0 %v787
    %836 = vmatpush.bf16.msra.mxu0 %v783
    %837 = vmatpush.bf16.msra.mxu0 %v779
    %838 = vmatpush.bf16.msra.mxu0 %v775
    %839 = vmatpush.bf16.msra.mxu0 %v771
    %840 = vmatpush.bf16.msra.mxu0 %v767
    %841 = vmatpush.bf16.msra.mxu0 %v763
    %842 = vmatpush.bf16.msra.mxu0 %v759
    %843 = vmatmul.bf16.gmra.mxu0 %v661
    %v844 = vpop.f32.mrf.mxu0
    %v845 = vadd.f32 0.0, %v844
    %v846 = vpop.f32.mrf.mxu0
    %847 = vdwg.mxu0
    %848 = vmatpush.bf16.msra.mxu0 %v788
    %849 = vmatpush.bf16.msra.mxu0 %v784
    %850 = vmatpush.bf16.msra.mxu0 %v780
    %851 = vmatpush.bf16.msra.mxu0 %v776
    %852 = vmatpush.bf16.msra.mxu0 %v772
    %853 = vmatpush.bf16.msra.mxu0 %v768
    %854 = vmatpush.bf16.msra.mxu0 %v764
    %855 = vmatpush.bf16.msra.mxu0 %v760
    %856 = vmatmul.bf16.gmra.mxu0 %v661
    %v857 = vpop.f32.mrf.mxu0
    %v858 = vadd.f32 0.0, %v857
    %v859 = vpop.f32.mrf.mxu0
    %860 = vdwg.mxu0
    %861 = vmatpush.bf16.msra.mxu0 %v789
    %862 = vmatpush.bf16.msra.mxu0 %v785
    %863 = vmatpush.bf16.msra.mxu0 %v781
    %864 = vmatpush.bf16.msra.mxu0 %v777
    %865 = vmatpush.bf16.msra.mxu0 %v773
    %866 = vmatpush.bf16.msra.mxu0 %v769
    %867 = vmatpush.bf16.msra.mxu0 %v765
    %868 = vmatpush.bf16.msra.mxu0 %v761
    %869 = vmatmul.bf16.gmra.mxu0 %v661
    %v870 = vpop.f32.mrf.mxu0
    %v871 = vadd.f32 0.0, %v870
    %v872 = vpop.f32.mrf.mxu0
    %873 = vdwg.mxu0
    %v874 = vadd.f32 %v657, %v832
    %v875 = vadd.f32 %v658, %v845
    %v876 = vadd.f32 %v659, %v858
    %v877 = vadd.f32 %v660, %v871
    %v878 = vmul.f32 %v874, 0.5
    %v879 = vtanh.pop %v878
    %v880 = vadd.f32 %v879, 1.0
    %v881 = vmul.f32 %v880, 0.5
    %v882 = vmul.f32 %v875, 0.5
    %v883 = vtanh.pop %v882
    %v884 = vadd.f32 %v883, 1.0
    %v885 = vmul.f32 %v884, 0.5
    %v886 = vtanh.pop %v876
    %v887 = vmul.f32 %v877, 0.5
    %v888 = vtanh.pop %v887
    %v889 = vadd.f32 %v888, 1.0
    %v890 = vmul.f32 %v889, 0.5
    %v891 = vmul.f32 %v885, %v656
    %v892 = vmul.f32 %v881, %v886
    %v893 = vadd.f32 %v891, %v892
    %v894 = vtanh.pop %v893
    %v895 = vmul.f32 %v890, %v894
    %v896 = vpack.c.bf16 %v895, %v895
    %897 = vst [vmem:[#allocation13] sm:$0xf] %v896
    %v898 = vld [vmem:[%s272] sm:$0xff]
    %v899 = vld [vmem:[%s272 + $0x8] sm:$0xff]
    %v900 = vld [vmem:[%s272 + $0x10] sm:$0xff]
    %v901 = vld [vmem:[%s272 + $0x18] sm:$0xff]
    %902 = vmatpush.bf16.msra.mxu0 %v786
    %903 = vmatpush.bf16.msra.mxu0 %v782
    %904 = vmatpush.bf16.msra.mxu0 %v778
    %905 = vmatpush.bf16.msra.mxu0 %v774
    %906 = vmatpush.bf16.msra.mxu0 %v770
    %907 = vmatpush.bf16.msra.mxu0 %v766
    %908 = vmatpush.bf16.msra.mxu0 %v762
    %909 = vmatpush.bf16.msra.mxu0 %v758
    %910 = vmatmul.bf16.gmra.mxu0 %v896
    %v911 = vpop.f32.mrf.mxu0
    %v912 = vadd.f32 0.0, %v911
    %v913 = vpop.f32.mrf.mxu0
    %914 = vdwg.mxu0
    %915 = vmatpush.bf16.msra.mxu0 %v787
    %916 = vmatpush.bf16.msra.mxu0 %v783
    %917 = vmatpush.bf16.msra.mxu0 %v779
    %918 = vmatpush.bf16.msra.mxu0 %v775
    %919 = vmatpush.bf16.msra.mxu0 %v771
    %920 = vmatpush.bf16.msra.mxu0 %v767
    %921 = vmatpush.bf16.msra.mxu0 %v763
    %922 = vmatpush.bf16.msra.mxu0 %v759
    %923 = vmatmul.bf16.gmra.mxu0 %v896
    %v924 = vpop.f32.mrf.mxu0
    %v925 = vadd.f32 0.0, %v924
    %v926 = vpop.f32.mrf.mxu0
    %927 = vdwg.mxu0
    %928 = vmatpush.bf16.msra.mxu0 %v788
    %929 = vmatpush.bf16.msra.mxu0 %v784
    %930 = vmatpush.bf16.msra.mxu0 %v780
    %931 = vmatpush.bf16.msra.mxu0 %v776
    %932 = vmatpush.bf16.msra.mxu0 %v772
    %933 = vmatpush.bf16.msra.mxu0 %v768
    %934 = vmatpush.bf16.msra.mxu0 %v764
    %935 = vmatpush.bf16.msra.mxu0 %v760
    %936 = vmatmul.bf16.gmra.mxu0 %v896
    %v937 = vpop.f32.mrf.mxu0
    %v938 = vadd.f32 0.0, %v937
    %v939 = vpop.f32.mrf.mxu0
    %940 = vdwg.mxu0
    %941 = vmatpush.bf16.msra.mxu0 %v789
    %942 = vmatpush.bf16.msra.mxu0 %v785
    %943 = vmatpush.bf16.msra.mxu0 %v781
    %944 = vmatpush.bf16.msra.mxu0 %v777
    %945 = vmatpush.bf16.msra.mxu0 %v773
    %946 = vmatpush.bf16.msra.mxu0 %v769
    %947 = vmatpush.bf16.msra.mxu0 %v765
    %948 = vmatpush.bf16.msra.mxu0 %v761
    %949 = vmatmul.bf16.gmra.mxu0 %v896
    %v950 = vpop.f32.mrf.mxu0
    %v951 = vadd.f32 0.0, %v950
    %v952 = vpop.f32.mrf.mxu0
    %953 = vdwg.mxu0
    %v954 = vadd.f32 %v898, %v912
    %v955 = vadd.f32 %v899, %v925
    %v956 = vadd.f32 %v900, %v938
    %v957 = vadd.f32 %v901, %v951
    %v958 = vmul.f32 %v954, 0.5
    %v959 = vtanh.pop %v958
    %v960 = vadd.f32 %v959, 1.0
    %v961 = vmul.f32 %v960, 0.5
    %v962 = vmul.f32 %v955, 0.5
    %v963 = vtanh.pop %v962
    %v964 = vadd.f32 %v963, 1.0
    %v965 = vmul.f32 %v964, 0.5
    %v966 = vtanh.pop %v956
    %v967 = vmul.f32 %v957, 0.5
    %v968 = vtanh.pop %v967
    %v969 = vadd.f32 %v968, 1.0
    %v970 = vmul.f32 %v969, 0.5
    %v971 = vmul.f32 %v965, %v893
    %v972 = vmul.f32 %v961, %v966
    %v973 = vadd.f32 %v971, %v972
    %v974 = vtanh.pop %v973
    %v975 = vmul.f32 %v970, %v974
    %v976 = vpack.c.bf16 %v975, %v975
    %s977 = scalar_lea.vmem [#allocation13], 4
    %978 = vst [vmem:[%s977] sm:$0xf] %v976
    %v979 = vld [vmem:[%s335] sm:$0xff]
    %v980 = vld [vmem:[%s335 + $0x8] sm:$0xff]
    %v981 = vld [vmem:[%s335 + $0x10] sm:$0xff]
    %v982 = vld [vmem:[%s335 + $0x18] sm:$0xff]
    %983 = vmatpush.bf16.msra.mxu0 %v786
    %984 = vmatpush.bf16.msra.mxu0 %v782
    %985 = vmatpush.bf16.msra.mxu0 %v778
    %986 = vmatpush.bf16.msra.mxu0 %v774
    %987 = vmatpush.bf16.msra.mxu0 %v770
    %988 = vmatpush.bf16.msra.mxu0 %v766
    %989 = vmatpush.bf16.msra.mxu0 %v762
    %990 = vmatpush.bf16.msra.mxu0 %v758
    %991 = vmatmul.bf16.gmra.mxu0 %v976
    %v992 = vpop.f32.mrf.mxu0
    %v993 = vadd.f32 0.0, %v992
    %v994 = vpop.f32.mrf.mxu0
    %995 = vdwg.mxu0
    %996 = vmatpush.bf16.msra.mxu0 %v787
    %997 = vmatpush.bf16.msra.mxu0 %v783
    %998 = vmatpush.bf16.msra.mxu0 %v779
    %999 = vmatpush.bf16.msra.mxu0 %v775
    %1000 = vmatpush.bf16.msra.mxu0 %v771
    %1001 = vmatpush.bf16.msra.mxu0 %v767
    %1002 = vmatpush.bf16.msra.mxu0 %v763
    %1003 = vmatpush.bf16.msra.mxu0 %v759
    %1004 = vmatmul.bf16.gmra.mxu0 %v976
    %v1005 = vpop.f32.mrf.mxu0
    %v1006 = vadd.f32 0.0, %v1005
    %v1007 = vpop.f32.mrf.mxu0
    %1008 = vdwg.mxu0
    %1009 = vmatpush.bf16.msra.mxu0 %v788
    %1010 = vmatpush.bf16.msra.mxu0 %v784
    %1011 = vmatpush.bf16.msra.mxu0 %v780
    %1012 = vmatpush.bf16.msra.mxu0 %v776
    %1013 = vmatpush.bf16.msra.mxu0 %v772
    %1014 = vmatpush.bf16.msra.mxu0 %v768
    %1015 = vmatpush.bf16.msra.mxu0 %v764
    %1016 = vmatpush.bf16.msra.mxu0 %v760
    %1017 = vmatmul.bf16.gmra.mxu0 %v976
    %v1018 = vpop.f32.mrf.mxu0
    %v1019 = vadd.f32 0.0, %v1018
    %v1020 = vpop.f32.mrf.mxu0
    %1021 = vdwg.mxu0
    %1022 = vmatpush.bf16.msra.mxu0 %v789
    %1023 = vmatpush.bf16.msra.mxu0 %v785
    %1024 = vmatpush.bf16.msra.mxu0 %v781
    %1025 = vmatpush.bf16.msra.mxu0 %v777
    %1026 = vmatpush.bf16.msra.mxu0 %v773
    %1027 = vmatpush.bf16.msra.mxu0 %v769
    %1028 = vmatpush.bf16.msra.mxu0 %v765
    %1029 = vmatpush.bf16.msra.mxu0 %v761
    %1030 = vmatmul.bf16.gmra.mxu0 %v976
    %v1031 = vpop.f32.mrf.mxu0
    %v1032 = vadd.f32 0.0, %v1031
    %v1033 = vpop.f32.mrf.mxu0
    %1034 = vdwg.mxu0
    %v1035 = vadd.f32 %v979, %v993
    %v1036 = vadd.f32 %v980, %v1006
    %v1037 = vadd.f32 %v981, %v1019
    %v1038 = vadd.f32 %v982, %v1032
    %v1039 = vmul.f32 %v1035, 0.5
    %v1040 = vtanh.pop %v1039
    %v1041 = vadd.f32 %v1040, 1.0
    %v1042 = vmul.f32 %v1041, 0.5
    %v1043 = vmul.f32 %v1036, 0.5
    %v1044 = vtanh.pop %v1043
    %v1045 = vadd.f32 %v1044, 1.0
    %v1046 = vmul.f32 %v1045, 0.5
    %v1047 = vtanh.pop %v1037
    %v1048 = vmul.f32 %v1038, 0.5
    %v1049 = vtanh.pop %v1048
    %v1050 = vadd.f32 %v1049, 1.0
    %v1051 = vmul.f32 %v1050, 0.5
    %v1052 = vmul.f32 %v1046, %v973
    %v1053 = vmul.f32 %v1042, %v1047
    %v1054 = vadd.f32 %v1052, %v1053
    %v1055 = vtanh.pop %v1054
    %v1056 = vmul.f32 %v1051, %v1055
    %v1057 = vpack.c.bf16 %v1056, %v1056
    %s1058 = scalar_lea.vmem [#allocation13], 8
    %1059 = vst [vmem:[%s1058] sm:$0xf] %v1057
    %v1060 = vld [vmem:[%s398] sm:$0xff]
    %v1061 = vld [vmem:[%s398 + $0x8] sm:$0xff]
    %v1062 = vld [vmem:[%s398 + $0x10] sm:$0xff]
    %v1063 = vld [vmem:[%s398 + $0x18] sm:$0xff]
    %1064 = vmatpush.bf16.msra.mxu0 %v786
    %1065 = vmatpush.bf16.msra.mxu0 %v782
    %1066 = vmatpush.bf16.msra.mxu0 %v778
    %1067 = vmatpush.bf16.msra.mxu0 %v774
    %1068 = vmatpush.bf16.msra.mxu0 %v770
    %1069 = vmatpush.bf16.msra.mxu0 %v766
    %1070 = vmatpush.bf16.msra.mxu0 %v762
    %1071 = vmatpush.bf16.msra.mxu0 %v758
    %1072 = vmatmul.bf16.gmra.mxu0 %v1057
    %v1073 = vpop.f32.mrf.mxu0
    %v1074 = vadd.f32 0.0, %v1073
    %v1075 = vpop.f32.mrf.mxu0
    %1076 = vdwg.mxu0
    %1077 = vmatpush.bf16.msra.mxu0 %v787
    %1078 = vmatpush.bf16.msra.mxu0 %v783
    %1079 = vmatpush.bf16.msra.mxu0 %v779
    %1080 = vmatpush.bf16.msra.mxu0 %v775
    %1081 = vmatpush.bf16.msra.mxu0 %v771
    %1082 = vmatpush.bf16.msra.mxu0 %v767
    %1083 = vmatpush.bf16.msra.mxu0 %v763
    %1084 = vmatpush.bf16.msra.mxu0 %v759
    %1085 = vmatmul.bf16.gmra.mxu0 %v1057
    %v1086 = vpop.f32.mrf.mxu0
    %v1087 = vadd.f32 0.0, %v1086
    %v1088 = vpop.f32.mrf.mxu0
    %1089 = vdwg.mxu0
    %1090 = vmatpush.bf16.msra.mxu0 %v788
    %1091 = vmatpush.bf16.msra.mxu0 %v784
    %1092 = vmatpush.bf16.msra.mxu0 %v780
    %1093 = vmatpush.bf16.msra.mxu0 %v776
    %1094 = vmatpush.bf16.msra.mxu0 %v772
    %1095 = vmatpush.bf16.msra.mxu0 %v768
    %1096 = vmatpush.bf16.msra.mxu0 %v764
    %1097 = vmatpush.bf16.msra.mxu0 %v760
    %1098 = vmatmul.bf16.gmra.mxu0 %v1057
    %v1099 = vpop.f32.mrf.mxu0
    %v1100 = vadd.f32 0.0, %v1099
    %v1101 = vpop.f32.mrf.mxu0
    %1102 = vdwg.mxu0
    %1103 = vmatpush.bf16.msra.mxu0 %v789
    %1104 = vmatpush.bf16.msra.mxu0 %v785
    %1105 = vmatpush.bf16.msra.mxu0 %v781
    %1106 = vmatpush.bf16.msra.mxu0 %v777
    %1107 = vmatpush.bf16.msra.mxu0 %v773
    %1108 = vmatpush.bf16.msra.mxu0 %v769
    %1109 = vmatpush.bf16.msra.mxu0 %v765
    %1110 = vmatpush.bf16.msra.mxu0 %v761
    %1111 = vmatmul.bf16.gmra.mxu0 %v1057
    %v1112 = vpop.f32.mrf.mxu0
    %v1113 = vadd.f32 0.0, %v1112
    %v1114 = vpop.f32.mrf.mxu0
    %1115 = vdwg.mxu0
    %v1116 = vadd.f32 %v1060, %v1074
    %v1117 = vadd.f32 %v1061, %v1087
    %v1118 = vadd.f32 %v1062, %v1100
    %v1119 = vadd.f32 %v1063, %v1113
    %v1120 = vmul.f32 %v1116, 0.5
    %v1121 = vtanh.pop %v1120
    %v1122 = vadd.f32 %v1121, 1.0
    %v1123 = vmul.f32 %v1122, 0.5
    %v1124 = vmul.f32 %v1117, 0.5
    %v1125 = vtanh.pop %v1124
    %v1126 = vadd.f32 %v1125, 1.0
    %v1127 = vmul.f32 %v1126, 0.5
    %v1128 = vtanh.pop %v1118
    %v1129 = vmul.f32 %v1119, 0.5
    %v1130 = vtanh.pop %v1129
    %v1131 = vadd.f32 %v1130, 1.0
    %v1132 = vmul.f32 %v1131, 0.5
    %v1133 = vmul.f32 %v1127, %v1054
    %v1134 = vmul.f32 %v1123, %v1128
    %v1135 = vadd.f32 %v1133, %v1134
    %v1136 = vtanh.pop %v1135
    %v1137 = vmul.f32 %v1132, %v1136
    %v1138 = vpack.c.bf16 %v1137, %v1137
    %s1139 = scalar_lea.vmem [#allocation13], 12
    %1140 = vst [vmem:[%s1139] sm:$0xf] %v1138
    %v1141 = vld [vmem:[%s461] sm:$0xff]
    %v1142 = vld [vmem:[%s461 + $0x8] sm:$0xff]
    %v1143 = vld [vmem:[%s461 + $0x10] sm:$0xff]
    %v1144 = vld [vmem:[%s461 + $0x18] sm:$0xff]
    %1145 = vmatpush.bf16.msra.mxu0 %v786
    %1146 = vmatpush.bf16.msra.mxu0 %v782
    %1147 = vmatpush.bf16.msra.mxu0 %v778
    %1148 = vmatpush.bf16.msra.mxu0 %v774
    %1149 = vmatpush.bf16.msra.mxu0 %v770
    %1150 = vmatpush.bf16.msra.mxu0 %v766
    %1151 = vmatpush.bf16.msra.mxu0 %v762
    %1152 = vmatpush.bf16.msra.mxu0 %v758
    %1153 = vmatmul.bf16.gmra.mxu0 %v1138
    %v1154 = vpop.f32.mrf.mxu0
    %v1155 = vadd.f32 0.0, %v1154
    %v1156 = vpop.f32.mrf.mxu0
    %1157 = vdwg.mxu0
    %1158 = vmatpush.bf16.msra.mxu0 %v787
    %1159 = vmatpush.bf16.msra.mxu0 %v783
    %1160 = vmatpush.bf16.msra.mxu0 %v779
    %1161 = vmatpush.bf16.msra.mxu0 %v775
    %1162 = vmatpush.bf16.msra.mxu0 %v771
    %1163 = vmatpush.bf16.msra.mxu0 %v767
    %1164 = vmatpush.bf16.msra.mxu0 %v763
    %1165 = vmatpush.bf16.msra.mxu0 %v759
    %1166 = vmatmul.bf16.gmra.mxu0 %v1138
    %v1167 = vpop.f32.mrf.mxu0
    %v1168 = vadd.f32 0.0, %v1167
    %v1169 = vpop.f32.mrf.mxu0
    %1170 = vdwg.mxu0
    %1171 = vmatpush.bf16.msra.mxu0 %v788
    %1172 = vmatpush.bf16.msra.mxu0 %v784
    %1173 = vmatpush.bf16.msra.mxu0 %v780
    %1174 = vmatpush.bf16.msra.mxu0 %v776
    %1175 = vmatpush.bf16.msra.mxu0 %v772
    %1176 = vmatpush.bf16.msra.mxu0 %v768
    %1177 = vmatpush.bf16.msra.mxu0 %v764
    %1178 = vmatpush.bf16.msra.mxu0 %v760
    %1179 = vmatmul.bf16.gmra.mxu0 %v1138
    %v1180 = vpop.f32.mrf.mxu0
    %v1181 = vadd.f32 0.0, %v1180
    %v1182 = vpop.f32.mrf.mxu0
    %1183 = vdwg.mxu0
    %1184 = vmatpush.bf16.msra.mxu0 %v789
    %1185 = vmatpush.bf16.msra.mxu0 %v785
    %1186 = vmatpush.bf16.msra.mxu0 %v781
    %1187 = vmatpush.bf16.msra.mxu0 %v777
    %1188 = vmatpush.bf16.msra.mxu0 %v773
    %1189 = vmatpush.bf16.msra.mxu0 %v769
    %1190 = vmatpush.bf16.msra.mxu0 %v765
    %1191 = vmatpush.bf16.msra.mxu0 %v761
    %1192 = vmatmul.bf16.gmra.mxu0 %v1138
    %v1193 = vpop.f32.mrf.mxu0
    %v1194 = vadd.f32 0.0, %v1193
    %v1195 = vpop.f32.mrf.mxu0
    %1196 = vdwg.mxu0
    %v1197 = vadd.f32 %v1141, %v1155
    %v1198 = vadd.f32 %v1142, %v1168
    %v1199 = vadd.f32 %v1143, %v1181
    %v1200 = vadd.f32 %v1144, %v1194
    %v1201 = vmul.f32 %v1197, 0.5
    %v1202 = vtanh.pop %v1201
    %v1203 = vadd.f32 %v1202, 1.0
    %v1204 = vmul.f32 %v1203, 0.5
    %v1205 = vmul.f32 %v1198, 0.5
    %v1206 = vtanh.pop %v1205
    %v1207 = vadd.f32 %v1206, 1.0
    %v1208 = vmul.f32 %v1207, 0.5
    %v1209 = vtanh.pop %v1199
    %v1210 = vmul.f32 %v1200, 0.5
    %v1211 = vtanh.pop %v1210
    %v1212 = vadd.f32 %v1211, 1.0
    %v1213 = vmul.f32 %v1212, 0.5
    %v1214 = vmul.f32 %v1208, %v1135
    %v1215 = vmul.f32 %v1204, %v1209
    %v1216 = vadd.f32 %v1214, %v1215
    %v1217 = vtanh.pop %v1216
    %v1218 = vmul.f32 %v1213, %v1217
    %v1219 = vpack.c.bf16 %v1218, %v1218
    %s1220 = scalar_lea.vmem [#allocation13], 16
    %1221 = vst [vmem:[%s1220] sm:$0xf] %v1219
    %v1222 = vld [vmem:[%s524] sm:$0xff]
    %v1223 = vld [vmem:[%s524 + $0x8] sm:$0xff]
    %v1224 = vld [vmem:[%s524 + $0x10] sm:$0xff]
    %v1225 = vld [vmem:[%s524 + $0x18] sm:$0xff]
    %1226 = vmatpush.bf16.msra.mxu0 %v786
    %1227 = vmatpush.bf16.msra.mxu0 %v782
    %1228 = vmatpush.bf16.msra.mxu0 %v778
    %1229 = vmatpush.bf16.msra.mxu0 %v774
    %1230 = vmatpush.bf16.msra.mxu0 %v770
    %1231 = vmatpush.bf16.msra.mxu0 %v766
    %1232 = vmatpush.bf16.msra.mxu0 %v762
    %1233 = vmatpush.bf16.msra.mxu0 %v758
    %1234 = vmatmul.bf16.gmra.mxu0 %v1219
    %v1235 = vpop.f32.mrf.mxu0
    %v1236 = vadd.f32 0.0, %v1235
    %v1237 = vpop.f32.mrf.mxu0
    %1238 = vdwg.mxu0
    %1239 = vmatpush.bf16.msra.mxu0 %v787
    %1240 = vmatpush.bf16.msra.mxu0 %v783
    %1241 = vmatpush.bf16.msra.mxu0 %v779
    %1242 = vmatpush.bf16.msra.mxu0 %v775
    %1243 = vmatpush.bf16.msra.mxu0 %v771
    %1244 = vmatpush.bf16.msra.mxu0 %v767
    %1245 = vmatpush.bf16.msra.mxu0 %v763
    %1246 = vmatpush.bf16.msra.mxu0 %v759
    %1247 = vmatmul.bf16.gmra.mxu0 %v1219
    %v1248 = vpop.f32.mrf.mxu0
    %v1249 = vadd.f32 0.0, %v1248
    %v1250 = vpop.f32.mrf.mxu0
    %1251 = vdwg.mxu0
    %1252 = vmatpush.bf16.msra.mxu0 %v788
    %1253 = vmatpush.bf16.msra.mxu0 %v784
    %1254 = vmatpush.bf16.msra.mxu0 %v780
    %1255 = vmatpush.bf16.msra.mxu0 %v776
    %1256 = vmatpush.bf16.msra.mxu0 %v772
    %1257 = vmatpush.bf16.msra.mxu0 %v768
    %1258 = vmatpush.bf16.msra.mxu0 %v764
    %1259 = vmatpush.bf16.msra.mxu0 %v760
    %1260 = vmatmul.bf16.gmra.mxu0 %v1219
    %v1261 = vpop.f32.mrf.mxu0
    %v1262 = vadd.f32 0.0, %v1261
    %v1263 = vpop.f32.mrf.mxu0
    %1264 = vdwg.mxu0
    %1265 = vmatpush.bf16.msra.mxu0 %v789
    %1266 = vmatpush.bf16.msra.mxu0 %v785
    %1267 = vmatpush.bf16.msra.mxu0 %v781
    %1268 = vmatpush.bf16.msra.mxu0 %v777
    %1269 = vmatpush.bf16.msra.mxu0 %v773
    %1270 = vmatpush.bf16.msra.mxu0 %v769
    %1271 = vmatpush.bf16.msra.mxu0 %v765
    %1272 = vmatpush.bf16.msra.mxu0 %v761
    %1273 = vmatmul.bf16.gmra.mxu0 %v1219
    %v1274 = vpop.f32.mrf.mxu0
    %v1275 = vadd.f32 0.0, %v1274
    %v1276 = vpop.f32.mrf.mxu0
    %1277 = vdwg.mxu0
    %v1278 = vadd.f32 %v1222, %v1236
    %v1279 = vadd.f32 %v1223, %v1249
    %v1280 = vadd.f32 %v1224, %v1262
    %v1281 = vadd.f32 %v1225, %v1275
    %v1282 = vmul.f32 %v1278, 0.5
    %v1283 = vtanh.pop %v1282
    %v1284 = vadd.f32 %v1283, 1.0
    %v1285 = vmul.f32 %v1284, 0.5
    %v1286 = vmul.f32 %v1279, 0.5
    %v1287 = vtanh.pop %v1286
    %v1288 = vadd.f32 %v1287, 1.0
    %v1289 = vmul.f32 %v1288, 0.5
    %v1290 = vtanh.pop %v1280
    %v1291 = vmul.f32 %v1281, 0.5
    %v1292 = vtanh.pop %v1291
    %v1293 = vadd.f32 %v1292, 1.0
    %v1294 = vmul.f32 %v1293, 0.5
    %v1295 = vmul.f32 %v1289, %v1216
    %v1296 = vmul.f32 %v1285, %v1290
    %v1297 = vadd.f32 %v1295, %v1296
    %v1298 = vtanh.pop %v1297
    %v1299 = vmul.f32 %v1294, %v1298
    %v1300 = vpack.c.bf16 %v1299, %v1299
    %s1301 = scalar_lea.vmem [#allocation13], 20
    %1302 = vst [vmem:[%s1301] sm:$0xf] %v1300
    %v1303 = vld [vmem:[%s587] sm:$0xff]
    %v1304 = vld [vmem:[%s587 + $0x8] sm:$0xff]
    %v1305 = vld [vmem:[%s587 + $0x10] sm:$0xff]
    %v1306 = vld [vmem:[%s587 + $0x18] sm:$0xff]
    %1307 = vmatpush.bf16.msra.mxu0 %v786
    %1308 = vmatpush.bf16.msra.mxu0 %v782
    %1309 = vmatpush.bf16.msra.mxu0 %v778
    %1310 = vmatpush.bf16.msra.mxu0 %v774
    %1311 = vmatpush.bf16.msra.mxu0 %v770
    %1312 = vmatpush.bf16.msra.mxu0 %v766
    %1313 = vmatpush.bf16.msra.mxu0 %v762
    %1314 = vmatpush.bf16.msra.mxu0 %v758
    %1315 = vmatmul.bf16.gmra.mxu0 %v1300
    %v1316 = vpop.f32.mrf.mxu0
    %v1317 = vadd.f32 0.0, %v1316
    %v1318 = vpop.f32.mrf.mxu0
    %1319 = vdwg.mxu0
    %1320 = vmatpush.bf16.msra.mxu0 %v787
    %1321 = vmatpush.bf16.msra.mxu0 %v783
    %1322 = vmatpush.bf16.msra.mxu0 %v779
    %1323 = vmatpush.bf16.msra.mxu0 %v775
    %1324 = vmatpush.bf16.msra.mxu0 %v771
    %1325 = vmatpush.bf16.msra.mxu0 %v767
    %1326 = vmatpush.bf16.msra.mxu0 %v763
    %1327 = vmatpush.bf16.msra.mxu0 %v759
    %1328 = vmatmul.bf16.gmra.mxu0 %v1300
    %v1329 = vpop.f32.mrf.mxu0
    %v1330 = vadd.f32 0.0, %v1329
    %v1331 = vpop.f32.mrf.mxu0
    %1332 = vdwg.mxu0
    %1333 = vmatpush.bf16.msra.mxu0 %v788
    %1334 = vmatpush.bf16.msra.mxu0 %v784
    %1335 = vmatpush.bf16.msra.mxu0 %v780
    %1336 = vmatpush.bf16.msra.mxu0 %v776
    %1337 = vmatpush.bf16.msra.mxu0 %v772
    %1338 = vmatpush.bf16.msra.mxu0 %v768
    %1339 = vmatpush.bf16.msra.mxu0 %v764
    %1340 = vmatpush.bf16.msra.mxu0 %v760
    %1341 = vmatmul.bf16.gmra.mxu0 %v1300
    %v1342 = vpop.f32.mrf.mxu0
    %v1343 = vadd.f32 0.0, %v1342
    %v1344 = vpop.f32.mrf.mxu0
    %1345 = vdwg.mxu0
    %1346 = vmatpush.bf16.msra.mxu0 %v789
    %1347 = vmatpush.bf16.msra.mxu0 %v785
    %1348 = vmatpush.bf16.msra.mxu0 %v781
    %1349 = vmatpush.bf16.msra.mxu0 %v777
    %1350 = vmatpush.bf16.msra.mxu0 %v773
    %1351 = vmatpush.bf16.msra.mxu0 %v769
    %1352 = vmatpush.bf16.msra.mxu0 %v765
    %1353 = vmatpush.bf16.msra.mxu0 %v761
    %1354 = vmatmul.bf16.gmra.mxu0 %v1300
    %v1355 = vpop.f32.mrf.mxu0
    %v1356 = vadd.f32 0.0, %v1355
    %v1357 = vpop.f32.mrf.mxu0
    %1358 = vdwg.mxu0
    %v1359 = vadd.f32 %v1303, %v1317
    %v1360 = vadd.f32 %v1304, %v1330
    %v1361 = vadd.f32 %v1305, %v1343
    %v1362 = vadd.f32 %v1306, %v1356
    %v1363 = vmul.f32 %v1359, 0.5
    %v1364 = vtanh.pop %v1363
    %v1365 = vadd.f32 %v1364, 1.0
    %v1366 = vmul.f32 %v1365, 0.5
    %v1367 = vmul.f32 %v1360, 0.5
    %v1368 = vtanh.pop %v1367
    %v1369 = vadd.f32 %v1368, 1.0
    %v1370 = vmul.f32 %v1369, 0.5
    %v1371 = vtanh.pop %v1361
    %v1372 = vmul.f32 %v1362, 0.5
    %v1373 = vtanh.pop %v1372
    %v1374 = vadd.f32 %v1373, 1.0
    %v1375 = vmul.f32 %v1374, 0.5
    %v1376 = vmul.f32 %v1370, %v1297
    %v1377 = vmul.f32 %v1366, %v1371
    %v1378 = vadd.f32 %v1376, %v1377
    %v1379 = vtanh.pop %v1378
    %v1380 = vmul.f32 %v1375, %v1379
    %v1381 = vpack.c.bf16 %v1380, %v1380
    %s1382 = scalar_lea.vmem [#allocation13], 24
    %1383 = vst [vmem:[%s1382] sm:$0xf] %v1381
    %v1384 = vld [vmem:[%s650] sm:$0xff]
    %v1385 = vld [vmem:[%s650 + $0x8] sm:$0xff]
    %v1386 = vld [vmem:[%s650 + $0x10] sm:$0xff]
    %v1387 = vld [vmem:[%s650 + $0x18] sm:$0xff]
    %1388 = vmatpush.bf16.msra.mxu0 %v786
    %1389 = vmatpush.bf16.msra.mxu0 %v782
    %1390 = vmatpush.bf16.msra.mxu0 %v778
    %1391 = vmatpush.bf16.msra.mxu0 %v774
    %1392 = vmatpush.bf16.msra.mxu0 %v770
    %1393 = vmatpush.bf16.msra.mxu0 %v766
    %1394 = vmatpush.bf16.msra.mxu0 %v762
    %1395 = vmatpush.bf16.msra.mxu0 %v758
    %1396 = vmatmul.bf16.gmra.mxu0 %v1381
    %v1397 = vpop.f32.mrf.mxu0
    %v1398 = vadd.f32 0.0, %v1397
    %v1399 = vpop.f32.mrf.mxu0
    %1400 = vdwg.mxu0
    %1401 = vmatpush.bf16.msra.mxu0 %v787
    %1402 = vmatpush.bf16.msra.mxu0 %v783
    %1403 = vmatpush.bf16.msra.mxu0 %v779
    %1404 = vmatpush.bf16.msra.mxu0 %v775
    %1405 = vmatpush.bf16.msra.mxu0 %v771
    %1406 = vmatpush.bf16.msra.mxu0 %v767
    %1407 = vmatpush.bf16.msra.mxu0 %v763
    %1408 = vmatpush.bf16.msra.mxu0 %v759
    %1409 = vmatmul.bf16.gmra.mxu0 %v1381
    %v1410 = vpop.f32.mrf.mxu0
    %v1411 = vadd.f32 0.0, %v1410
    %v1412 = vpop.f32.mrf.mxu0
    %1413 = vdwg.mxu0
    %1414 = vmatpush.bf16.msra.mxu0 %v788
    %1415 = vmatpush.bf16.msra.mxu0 %v784
    %1416 = vmatpush.bf16.msra.mxu0 %v780
    %1417 = vmatpush.bf16.msra.mxu0 %v776
    %1418 = vmatpush.bf16.msra.mxu0 %v772
    %1419 = vmatpush.bf16.msra.mxu0 %v768
    %1420 = vmatpush.bf16.msra.mxu0 %v764
    %1421 = vmatpush.bf16.msra.mxu0 %v760
    %1422 = vmatmul.bf16.gmra.mxu0 %v1381
    %v1423 = vpop.f32.mrf.mxu0
    %v1424 = vadd.f32 0.0, %v1423
    %v1425 = vpop.f32.mrf.mxu0
    %1426 = vdwg.mxu0
    %1427 = vmatpush.bf16.msra.mxu0 %v789
    %1428 = vmatpush.bf16.msra.mxu0 %v785
    %1429 = vmatpush.bf16.msra.mxu0 %v781
    %1430 = vmatpush.bf16.msra.mxu0 %v777
    %1431 = vmatpush.bf16.msra.mxu0 %v773
    %1432 = vmatpush.bf16.msra.mxu0 %v769
    %1433 = vmatpush.bf16.msra.mxu0 %v765
    %1434 = vmatpush.bf16.msra.mxu0 %v761
    %1435 = vmatmul.bf16.gmra.mxu0 %v1381
    %v1436 = vpop.f32.mrf.mxu0
    %v1437 = vadd.f32 0.0, %v1436
    %v1438 = vpop.f32.mrf.mxu0
    %1439 = vdwg.mxu0
    %v1440 = vadd.f32 %v1384, %v1398
    %v1441 = vadd.f32 %v1385, %v1411
    %v1442 = vadd.f32 %v1386, %v1424
    %v1443 = vadd.f32 %v1387, %v1437
    %v1444 = vmul.f32 %v1440, 0.5
    %v1445 = vtanh.pop %v1444
    %v1446 = vadd.f32 %v1445, 1.0
    %v1447 = vmul.f32 %v1446, 0.5
    %v1448 = vmul.f32 %v1441, 0.5
    %v1449 = vtanh.pop %v1448
    %v1450 = vadd.f32 %v1449, 1.0
    %v1451 = vmul.f32 %v1450, 0.5
    %v1452 = vtanh.pop %v1442
    %v1453 = vmul.f32 %v1443, 0.5
    %v1454 = vtanh.pop %v1453
    %v1455 = vadd.f32 %v1454, 1.0
    %v1456 = vmul.f32 %v1455, 0.5
    %v1457 = vmul.f32 %v1451, %v1378
    %v1458 = vmul.f32 %v1447, %v1452
    %v1459 = vadd.f32 %v1457, %v1458
    %v1460 = vtanh.pop %v1459
    %v1461 = vmul.f32 %v1456, %v1460
    %v1462 = vpack.c.bf16 %v1461, %v1461
    %s1463 = scalar_lea.vmem [#allocation13], 28
    %1464 = vst [vmem:[%s1463] sm:$0xf] %v1462
    %1465 = vst [vmem:[#allocation3] sm:$0xff] %v1461
    %1466 = vst [vmem:[#allocation4] sm:$0xff] %v1459
    // Predicated region
    $region38: #{tpu_custom_call.1} parent=1 // pred_check
      _
    $region39: #{tpu_custom_call.1} parent=1 // pred_check_branch
      %1468 = sbr.rel (0) target = $region41
    $region40: #{tpu_custom_call.1} parent=1 // pred_region
      %1470 = vsyncadd [#allocation7], 0
      %s1471 = sshll.u32 [#allocation13], 4
      %s1472 = int_to_ptr.vmem [resolvable:$true] %s1471
      %s1473 = sshll.u32 %s4, 4
      %s1474 = int_to_ptr.hbm [resolvable:$true] %s1473
      %1479 = dma.vmem_to_hbm [thread:$0]  %s1472, 512, %s1474, [#allocation7], 64, 64, 4
    $region41: #{tpu_custom_call.1} parent=1 // pred_fallthru
      _
    // Predicated region
    $region42: #{tpu_custom_call.1} parent=1 // pred_check
      _
    $region43: #{tpu_custom_call.1} parent=1 // pred_check_branch
      %1481 = sbr.rel (0) target = $region45
    $region44: #{tpu_custom_call.1} parent=1 // pred_region
      %1483 = dma.done [#allocation7], 512
    $region45: #{tpu_custom_call.1} parent=1 // pred_fallthru
      _
    %1484 = vsyncpa [#allocation6], 1
    %1485 = vsyncpa [#allocation9], 1
    %1486 = vsyncpa [#allocation12], 1
    %1487 = vsyncpa [#allocation7], 1

</llo_original>
